<compile_context>
chip_gen: v6e
topology: v6e:2x2x1
jax: 0.10.0
libtpu: 0.0.40
codegen_flags: <defaults>
</compile_context>

<pallas_src>
import math
import functools

import jax
import jax.numpy as jnp
from jax import lax
from jax.experimental import pallas as pl
from jax.experimental.pallas import tpu as pltpu

LANE = 128


def _round_up(x, m):
    return ((x + m - 1) // m) * m


def _pad_dim(a, axis, size):
    pad = size - a.shape[axis]
    if pad <= 0:
        return a
    widths = [(0, 0)] * a.ndim
    widths[axis] = (0, pad)
    return jnp.pad(a, widths)


# ------------------------------ in-kernel helpers ------------------------------

def _layer_norm(x, g, b, eps=1e-5):
    mu = jnp.mean(x, axis=-1, keepdims=True)
    var = jnp.mean((x - mu) ** 2, axis=-1, keepdims=True)
    return (x - mu) * lax.rsqrt(var + eps) * g + b


def _gelu(x):
    # TODO(synk): PyTorch activation='gelu' uses the exact erf GELU; erf has no guaranteed
    # Mosaic lowering, so the numerically-close tanh form is used (~1e-3 drift).
    c = math.sqrt(2.0 / math.pi)
    return 0.5 * x * (1.0 + jnp.tanh(c * (x + 0.044715 * x * x * x)))


# -------------------------------- Pallas kernels --------------------------------

def encode_fuse_kernel(mel_ref, pro_ref, emo_ref, pe_ref,
                       wm1_ref, bm1_ref, wm2_ref, bm2_ref,
                       wp1_ref, bp1_ref, wp2_ref, bp2_ref,
                       we_ref, be_ref,
                       wfm_ref, wfp_ref, wfe_ref, bf_ref,
                       out_ref, *, compute_dtype):
    """Stream encoders + 'concat' fusion + positional add for one (1, Tt, .) tile.
    Weights arrive pre-cast to compute_dtype; accumulation & elementwise math stay f32."""
    f32 = jnp.float32
    cd = compute_dtype

    def mm(a, w_ref):
        return jnp.dot(a.astype(cd), w_ref[...], preferred_element_type=f32)

    mel = mel_ref[0]
    pro = pro_ref[0]
    emo = emo_ref[0]
    # mel branch: Linear -> ReLU -> (Dropout) -> Linear
    h = jnp.maximum(mm(mel, wm1_ref) + bm1_ref[...], 0.0)
    mel_enc = mm(h, wm2_ref) + bm2_ref[...]
    # prosody branch: Linear -> ReLU -> (Dropout) -> Linear
    h = jnp.maximum(mm(pro, wp1_ref) + bp1_ref[...], 0.0)
    pro_enc = mm(h, wp2_ref) + bp2_ref[...]
    # emotion branch: Linear -> ReLU -> (Dropout)
    emo_enc = jnp.maximum(mm(emo, we_ref) + be_ref[...], 0.0)
    # 'concat' fusion: cat([m, p, e], -1) @ Wf == m @ Wf_m + p @ Wf_p + e @ Wf_e
    fused = (mm(mel_enc, wfm_ref) + mm(pro_enc, wfp_ref) + mm(emo_enc, wfe_ref)
             + bf_ref[...])
    out_ref[0] = (fused + pe_ref[...]).astype(out_ref.dtype)


def transformer_layer_kernel(x_ref,
                             wqkv_ref, bqkv_ref, wo_ref, bo_ref,
                             ln1g_ref, ln1b_ref,
                             w1_ref, b1_ref, w2_ref, b2_ref, ln2g_ref, ln2b_ref,
                             lng_ref, lnb_ref,
                             out_ref,
                             x_scratch,
                             *, nhead, head_dim, q_tile, compute_dtype):
    """One nn.TransformerEncoderLayer (post-norm, GELU FFN) per grid step; grid = (B, L).
    Layer weights are streamed per step (block index = l); the (T, D) activation is carried
    across the layer axis in an f32 VMEM scratch.  Final nn.LayerNorm fused at the last layer."""
    f32 = jnp.float32
    cd = compute_dtype
    l = pl.program_id(1)
    T, D = x_scratch.shape
    H, hd = nhead, head_dim
    scale = 1.0 / math.sqrt(hd)

    @pl.when(l == 0)
    def _():
        x_scratch[...] = x_ref[0].astype(f32)

    x = x_scratch[...]                                              # (T, D) f32
    x_cd = x.astype(cd)

    # ---- fused QKV projection: one lane-dense (T, D) @ (D, 3D) matmul ----
    qkv = jnp.dot(x_cd, wqkv_ref[0], preferred_element_type=f32) + bqkv_ref[0]   # (T, 3D)
    q_cd = (qkv[:, :D] * scale).astype(cd)          # softmax 1/sqrt(hd) folded into q once
    k_cd = qkv[:, D:2 * D].astype(cd)
    v_cd = qkv[:, 2 * D:].astype(cd)
    # head split via lane slices + leading-dim stack (avoids minor-dim reshapes/transposes)
    qh = jnp.stack([q_cd[:, h * hd:(h + 1) * hd] for h in range(H)], axis=0)   # (H, T, hd)
    kh = jnp.stack([k_cd[:, h * hd:(h + 1) * hd] for h in range(H)], axis=0)
    vh = jnp.stack([v_cd[:, h * hd:(h + 1) * hd] for h in range(H)], axis=0)

    # ---- attention, query-tiled so the score tensor is bounded to (H, tq, T) ----
    # TODO(synk): for very long T also tile KV with an online-softmax accumulator.
    ctx_tiles = []
    for qs in range(0, T, q_tile):
        qt = qh[:, qs:qs + q_tile, :]                               # (H, tq, hd)
        s = jnp.einsum('hqf,hkf->hqk', qt, kh, preferred_element_type=jnp.float32)
        s = s - jnp.max(s, axis=-1, keepdims=True)
        p = jnp.exp(s)
        inv = pl.reciprocal(jnp.sum(p, axis=-1, keepdims=True), approx=True)    # (H, tq, 1)
        ct = jnp.einsum('hqk,hkf->hqf', p.astype(cd), vh,
                        preferred_element_type=jnp.float32) * inv   # normalize AFTER PV
        ctx_tiles.append(ct)
    ctx = ctx_tiles[0] if len(ctx_tiles) == 1 else jnp.concatenate(ctx_tiles, axis=1)
    # concat heads along lanes -> (T, D), then one merged (T, D) @ (D, D) output projection
    ctx2d = jnp.concatenate([ctx[h] for h in range(H)], axis=1)
    attn = jnp.dot(ctx2d.astype(cd), wo_ref[0], preferred_element_type=f32) + bo_ref[0]

    # ---- post-norm residual blocks (norm_first=False default) ----
    x = _layer_norm(x + attn, ln1g_ref[0], ln1b_ref[0])
    h1 = _gelu(jnp.dot(x.astype(cd), w1_ref[0], preferred_element_type=f32) + b1_ref[0])
    ff = jnp.dot(h1.astype(cd), w2_ref[0], preferred_element_type=f32) + b2_ref[0]
    x = _layer_norm(x + ff, ln2g_ref[0], ln2b_ref[0])
    x_scratch[...] = x

    @pl.when(l == pl.num_programs(1) - 1)
    def _():
        # final nn.LayerNorm fused here (saves one HBM round trip of the activation)
        out_ref[0] = _layer_norm(x, lng_ref[...], lnb_ref[...]).astype(out_ref.dtype)


# ------------------------------- params / glue -----------------------------------

def _linear_params(key, fan_in, fan_out):
    kw, kb = jax.random.split(key)
    bound = 1.0 / math.sqrt(fan_in)
    w = jax.random.uniform(kw, (fan_in, fan_out), jnp.float32, -bound, bound)
    b = jax.random.uniform(kb, (1, fan_out), jnp.float32, -bound, bound)
    return w, b


def init_params(key, mel_dim, prosody_dim, emotion_dim, d_model, num_layers):
    keys = iter(jax.random.split(key, 16 + 8 * num_layers))
    p = {'d_model': d_model}
    p['wm1'], p['bm1'] = _linear_params(next(keys), mel_dim, d_model // 2)
    p['wm2'], p['bm2'] = _linear_params(next(keys), d_model // 2, d_model)
    p['wp1'], p['bp1'] = _linear_params(next(keys), prosody_dim, d_model // 4)
    p['wp2'], p['bp2'] = _linear_params(next(keys), d_model // 4, d_model)
    p['we'], p['be'] = _linear_params(next(keys), emotion_dim, d_model)
    wf, bf = _linear_params(next(keys), 3 * d_model, d_model)
    p['wfm'], p['wfp'], p['wfe'] = wf[:d_model], wf[d_model:2 * d_model], wf[2 * d_model:]
    p['bf'] = bf
    layers = []
    for _ in range(num_layers):
        lp = {}
        lp['wq'], lp['bq'] = _linear_params(next(keys), d_model, d_model)
        lp['wk'], lp['bk'] = _linear_params(next(keys), d_model, d_model)
        lp['wv'], lp['bv'] = _linear_params(next(keys), d_model, d_model)
        lp['wo'], lp['bo'] = _linear_params(next(keys), d_model, d_model)
        lp['ln1g'] = jnp.ones((1, d_model), jnp.float32)
        lp['ln1b'] = jnp.zeros((1, d_model), jnp.float32)
        lp['w1'], lp['b1'] = _linear_params(next(keys), d_model, 4 * d_model)
        lp['w2'], lp['b2'] = _linear_params(next(keys), 4 * d_model, d_model)
        lp['ln2g'] = jnp.ones((1, d_model), jnp.float32)
        lp['ln2b'] = jnp.zeros((1, d_model), jnp.float32)
        layers.append(lp)
    p['layers'] = layers
    p['lng'] = jnp.ones((1, d_model), jnp.float32)
    p['lnb'] = jnp.zeros((1, d_model), jnp.float32)
    return p


def positional_encoding(seq_len, d_model):
    position = jnp.arange(seq_len, dtype=jnp.float32)[:, None]
    div_term = jnp.exp(jnp.arange(0, d_model, 2, dtype=jnp.float32)
                       * (-math.log(10000.0) / d_model))
    pe = jnp.zeros((seq_len, d_model), jnp.float32)
    pe = pe.at[:, 0::2].set(jnp.sin(position * div_term))
    pe = pe.at[:, 1::2].set(jnp.cos(position * div_term))
    return pe


def _prepare_fuse_params(p, mel_dim, prosody_dim, emotion_dim, cd):
    """Zero-pad stream feature dims / hidden widths to lane multiples (exact) and pre-cast
    matmul weights to compute_dtype; biases stay f32 (added to f32 accumulators)."""
    D = p['d_model']
    mel_p = _round_up(mel_dim, LANE)
    pro_p = _round_up(prosody_dim, LANE)
    emo_p = _round_up(emotion_dim, LANE)
    hm = _round_up(D // 2, LANE)
    hp = _round_up(D // 4, LANE)
    w = dict(
        wm1=_pad_dim(_pad_dim(p['wm1'], 0, mel_p), 1, hm).astype(cd),
        bm1=_pad_dim(p['bm1'], 1, hm),
        wm2=_pad_dim(p['wm2'], 0, hm).astype(cd), bm2=p['bm2'],
        wp1=_pad_dim(_pad_dim(p['wp1'], 0, pro_p), 1, hp).astype(cd),
        bp1=_pad_dim(p['bp1'], 1, hp),
        wp2=_pad_dim(p['wp2'], 0, hp).astype(cd), bp2=p['bp2'],
        we=_pad_dim(p['we'], 0, emo_p).astype(cd), be=p['be'],
        wfm=p['wfm'].astype(cd), wfp=p['wfp'].astype(cd), wfe=p['wfe'].astype(cd),
        bf=p['bf'],
    )
    return w, (mel_p, pro_p, emo_p)


def _prepare_transformer_params(p, cd):
    """Stack per-layer weights on a leading L axis; concatenate Wq|Wk|Wv into (L, D, 3D)
    so the QKV projection is a single lane-dense matmul; pre-cast matmul weights to cd."""
    layers = p['layers']
    stk = lambda name: jnp.stack([lp[name] for lp in layers], axis=0)
    wqkv = jnp.stack([jnp.concatenate([lp['wq'], lp['wk'], lp['wv']], axis=1)
                      for lp in layers], axis=0).astype(cd)          # (L, D, 3D)
    bqkv = jnp.stack([jnp.concatenate([lp['bq'], lp['bk'], lp['bv']], axis=1)
                      for lp in layers], axis=0)                     # (L, 1, 3D) f32
    return dict(
        wqkv=wqkv, bqkv=bqkv,
        wo=stk('wo').astype(cd), bo=stk('bo'),
        ln1g=stk('ln1g'), ln1b=stk('ln1b'),
        w1=stk('w1').astype(cd), b1=stk('b1'),
        w2=stk('w2').astype(cd), b2=stk('b2'),
        ln2g=stk('ln2g'), ln2b=stk('ln2b'),
    )


def _vmem_limit_bytes():
    """Generation-aware scoped-VMEM limit: ~85% of physical, capped at 112 MiB (v5e/v6e),
    conservative 64 MiB assumption if the query fails (safe on v7x)."""
    cap = 64 * 1024 * 1024
    try:
        cap = int(pltpu.get_tpu_info().vmem_capacity_bytes)
    except Exception:
        pass
    return min(int(cap * 0.85), 112 * 1024 * 1024)


def _divisor_tile(T, target):
    """Largest multiple-of-8 divisor of T that is <= target (or T itself)."""
    if T <= target:
        return T
    for t in range(target, 7, -1):
        if T % t == 0 and t % 8 == 0:
            return t
    return T


def multi_stream_audio_encoder(mel, prosody, emotion, params, nhead=8,
                               compute_dtype=jnp.bfloat16):
    """mel (B,T,mel_dim), prosody (B,T,prosody_dim), emotion (B,T,emotion_dim) -> (B,T,D) f32.
    mask=None path (no key-padding mask), dropout = identity (eval mode).
    Matmul weights are pre-cast to compute_dtype (bf16 default); accumulation and all
    LayerNorm/GELU/softmax/residual math stay f32."""
    B, T, mel_dim = mel.shape
    prosody_dim = prosody.shape[-1]
    emotion_dim = emotion.shape[-1]
    D = params['d_model']
    L = len(params['layers'])
    hd = D // nhead
    cd = compute_dtype
    itemsize = jnp.dtype(cd).itemsize
    vmem_limit = _vmem_limit_bytes()

    # -------- kernel 1: stream encoders + concat fusion + positional encoding --------
    fw, (mel_p, pro_p, emo_p) = _prepare_fuse_params(params, mel_dim, prosody_dim,
                                                     emotion_dim, cd)
    mel_in = _pad_dim(mel, 2, mel_p)          # zero pad -> numerically exact
    pro_in = _pad_dim(prosody, 2, pro_p)
    emo_in = _pad_dim(emotion, 2, emo_p)
    pe = positional_encoding(T, D)            # (T, D), indexed per T-tile (never tiled over B)

    tile_t = _divisor_tile(T, 1024 if vmem_limit >= 96 * 1024 * 1024 else 512)
    n_t = T // tile_t

    fuse_weights = (fw['wm1'], fw['bm1'], fw['wm2'], fw['bm2'],
                    fw['wp1'], fw['bp1'], fw['wp2'], fw['bp2'],
                    fw['we'], fw['be'],
                    fw['wfm'], fw['wfp'], fw['wfe'], fw['bf'])

    def const_fuse(w):
        # constant block index => fetched once, VMEM-resident across the whole grid
        # TODO(synk): pipeline_mode=pl.Buffered(1) would halve resident-weight VMEM.
        zeros = (0,) * w.ndim
        return pl.BlockSpec(w.shape, lambda t, b: zeros)

    hm, hp = fw['wm1'].shape[1], fw['wp1'].shape[1]
    fuse_flops = 2 * B * T * (mel_p * hm + hm * D + pro_p * hp + hp * D
                              + emo_p * D + 3 * D * D)
    fuse_bytes = int(4 * B * T * (mel_p + pro_p + emo_p) + 4 * T * D
                     + itemsize * B * T * D
                     + sum(int(w.size) * w.dtype.itemsize for w in fuse_weights))

    fused = pl.pallas_call(
        functools.partial(encode_fuse_kernel, compute_dtype=cd),
        out_shape=jax.ShapeDtypeStruct((B, T, D), cd),   # bf16 intermediate: halves HBM trip
        grid=(n_t, B),                                   # PE tile constant over the inner axis
        in_specs=[pl.BlockSpec((1, tile_t, mel_p), lambda t, b: (b, t, 0)),
                  pl.BlockSpec((1, tile_t, pro_p), lambda t, b: (b, t, 0)),
                  pl.BlockSpec((1, tile_t, emo_p), lambda t, b: (b, t, 0)),
                  pl.BlockSpec((tile_t, D), lambda t, b: (t, 0))]
                 + [const_fuse(w) for w in fuse_weights],
        out_specs=pl.BlockSpec((1, tile_t, D), lambda t, b: (b, t, 0)),
        compiler_params=pltpu.CompilerParams(
            dimension_semantics=("parallel", "parallel"),
            vmem_limit_bytes=vmem_limit),
        cost_estimate=pl.CostEstimate(flops=int(fuse_flops), transcendentals=0,
                                      bytes_accessed=fuse_bytes),
    )(mel_in, pro_in, emo_in, pe, *fuse_weights)

    # -------- kernel 2: transformer stack (layer-streamed) + final LayerNorm --------
    sp = _prepare_transformer_params(params, cd)
    tw = (sp['wqkv'], sp['bqkv'], sp['wo'], sp['bo'],
          sp['ln1g'], sp['ln1b'],
          sp['w1'], sp['b1'], sp['w2'], sp['b2'], sp['ln2g'], sp['ln2b'])
    final_ln = (params['lng'], params['lnb'])

    def layer_spec(w):
        zeros = (0,) * (w.ndim - 1)
        return pl.BlockSpec((1,) + w.shape[1:], lambda b, l: (l,) + zeros)

    def const_tr(w):
        zeros = (0,) * w.ndim
        return pl.BlockSpec(w.shape, lambda b, l: zeros)

    q_tile = _divisor_tile(T, 256)

    layer_flops = (2 * T * D * 3 * D + 4 * T * T * D + 2 * T * D * D
                   + 2 * 2 * T * D * 4 * D)
    tr_flops = int(B * L * layer_flops)
    tr_trans = int(B * L * (nhead * T * T + T * 4 * D))
    tr_bytes = int(itemsize * B * T * D + 4 * B * T * D
                   + B * sum(int(w.size) * w.dtype.itemsize for w in tw + final_ln))

    out = pl.pallas_call(
        functools.partial(transformer_layer_kernel, nhead=nhead, head_dim=hd,
                          q_tile=q_tile, compute_dtype=cd),
        out_shape=jax.ShapeDtypeStruct((B, T, D), jnp.float32),
        grid=(B, L),      # weights streamed per layer -> per-step VMEM = one layer's worth
        in_specs=[pl.BlockSpec((1, T, D), lambda b, l: (b, 0, 0))]
                 + [layer_spec(w) for w in tw]
                 + [const_tr(w) for w in final_ln],
        out_specs=pl.BlockSpec((1, T, D), lambda b, l: (b, 0, 0)),
        scratch_shapes=[pltpu.VMEM((T, D), jnp.float32)],
        compiler_params=pltpu.CompilerParams(
            dimension_semantics=("parallel", "arbitrary"),
            vmem_limit_bytes=vmem_limit),
        cost_estimate=pl.CostEstimate(flops=tr_flops, transcendentals=tr_trans,
                                      bytes_accessed=tr_bytes),
    )(fused, *tw, *final_ln)
    return out


# ------------------------------------- main ---------------------------------------

if __name__ == "__main__":
    B, T = 2, 8
    mel_dim, prosody_dim, emotion_dim = 16, 4, 32
    d_model, num_layers, nhead = 32, 2, 8

    key = jax.random.PRNGKey(0)
    kp, km, kpr, ke = jax.random.split(key, 4)
    params = init_params(kp, mel_dim, prosody_dim, emotion_dim, d_model, num_layers)
    mel = jax.random.normal(km, (B, T, mel_dim), jnp.float32)
    prosody = jax.random.normal(kpr, (B, T, prosody_dim), jnp.float32)
    emotion = jax.random.normal(ke, (B, T, emotion_dim), jnp.float32)

    out = multi_stream_audio_encoder(mel, prosody, emotion, params, nhead=nhead)
    jax.block_until_ready(out)
    assert out.shape == (B, T, d_model)
    assert bool(jnp.all(jnp.isfinite(out)))
    print("KERNEL_OK")
</pallas_src>

<mosaic_0001>
module attributes {stable_mosaic.version = 11 : i64} {
  func.func @encode_fuse_kernel(%arg0: i32, %arg1: i32, %arg2: memref<1x8x128xf32, #tpu.memory_space<vmem>>, %arg3: memref<1x8x128xf32, #tpu.memory_space<vmem>>, %arg4: memref<1x8x128xf32, #tpu.memory_space<vmem>>, %arg5: memref<8x32xf32, #tpu.memory_space<vmem>>, %arg6: memref<128x128xbf16, #tpu.memory_space<vmem>>, %arg7: memref<1x128xf32, #tpu.memory_space<vmem>>, %arg8: memref<128x32xbf16, #tpu.memory_space<vmem>>, %arg9: memref<1x32xf32, #tpu.memory_space<vmem>>, %arg10: memref<128x128xbf16, #tpu.memory_space<vmem>>, %arg11: memref<1x128xf32, #tpu.memory_space<vmem>>, %arg12: memref<128x32xbf16, #tpu.memory_space<vmem>>, %arg13: memref<1x32xf32, #tpu.memory_space<vmem>>, %arg14: memref<128x32xbf16, #tpu.memory_space<vmem>>, %arg15: memref<1x32xf32, #tpu.memory_space<vmem>>, %arg16: memref<32x32xbf16, #tpu.memory_space<vmem>>, %arg17: memref<32x32xbf16, #tpu.memory_space<vmem>>, %arg18: memref<32x32xbf16, #tpu.memory_space<vmem>>, %arg19: memref<1x32xf32, #tpu.memory_space<vmem>>, %arg20: memref<1x8x32xbf16, #tpu.memory_space<vmem>>) attributes {dimension_semantics = [#tpu.dimension_semantics<parallel>, #tpu.dimension_semantics<parallel>], iteration_bounds = array<i64: 1, 2>, scalar_prefetch = 0 : i64, scratch_operands = 0 : i64, tpu.core_type = #tpu.core_type<tc>, window_params = [{transform_indices = @transform_0, window_bounds = array<i64: 1, 8, 128>}, {transform_indices = @transform_1, window_bounds = array<i64: 1, 8, 128>}, {transform_indices = @transform_2, window_bounds = array<i64: 1, 8, 128>}, {transform_indices = @transform_3, window_bounds = array<i64: 8, 32>}, {pipeline_mode = #tpu.pipeline_mode<synchronous>, transform_indices = @transform_4, window_bounds = array<i64: 128, 128>}, {pipeline_mode = #tpu.pipeline_mode<synchronous>, transform_indices = @transform_5, window_bounds = array<i64: 1, 128>}, {pipeline_mode = #tpu.pipeline_mode<synchronous>, transform_indices = @transform_6, window_bounds = array<i64: 128, 32>}, {pipeline_mode = #tpu.pipeline_mode<synchronous>, transform_indices = @transform_7, window_bounds = array<i64: 1, 32>}, {pipeline_mode = #tpu.pipeline_mode<synchronous>, transform_indices = @transform_8, window_bounds = array<i64: 128, 128>}, {pipeline_mode = #tpu.pipeline_mode<synchronous>, transform_indices = @transform_9, window_bounds = array<i64: 1, 128>}, {pipeline_mode = #tpu.pipeline_mode<synchronous>, transform_indices = @transform_10, window_bounds = array<i64: 128, 32>}, {pipeline_mode = #tpu.pipeline_mode<synchronous>, transform_indices = @transform_11, window_bounds = array<i64: 1, 32>}, {pipeline_mode = #tpu.pipeline_mode<synchronous>, transform_indices = @transform_12, window_bounds = array<i64: 128, 32>}, {pipeline_mode = #tpu.pipeline_mode<synchronous>, transform_indices = @transform_13, window_bounds = array<i64: 1, 32>}, {pipeline_mode = #tpu.pipeline_mode<synchronous>, transform_indices = @transform_14, window_bounds = array<i64: 32, 32>}, {pipeline_mode = #tpu.pipeline_mode<synchronous>, transform_indices = @transform_15, window_bounds = array<i64: 32, 32>}, {pipeline_mode = #tpu.pipeline_mode<synchronous>, transform_indices = @transform_16, window_bounds = array<i64: 32, 32>}, {pipeline_mode = #tpu.pipeline_mode<synchronous>, transform_indices = @transform_17, window_bounds = array<i64: 1, 32>}, {transform_indices = @transform_18, window_bounds = array<i64: 1, 8, 32>}]} {
    %c0 = arith.constant 0 : index
    %c0_0 = arith.constant 0 : index
    %c0_1 = arith.constant 0 : index
    %0 = vector.load %arg2[%c0, %c0_0, %c0_1] : memref<1x8x128xf32, #tpu.memory_space<vmem>>, vector<1x8x128xf32>
    %1 = vector.shape_cast %0 : vector<1x8x128xf32> to vector<8x128xf32>
    %c0_2 = arith.constant 0 : index
    %c0_3 = arith.constant 0 : index
    %c0_4 = arith.constant 0 : index
    %2 = vector.load %arg3[%c0_2, %c0_3, %c0_4] : memref<1x8x128xf32, #tpu.memory_space<vmem>>, vector<1x8x128xf32>
    %3 = vector.shape_cast %2 : vector<1x8x128xf32> to vector<8x128xf32>
    %c0_5 = arith.constant 0 : index
    %c0_6 = arith.constant 0 : index
    %c0_7 = arith.constant 0 : index
    %4 = vector.load %arg4[%c0_5, %c0_6, %c0_7] : memref<1x8x128xf32, #tpu.memory_space<vmem>>, vector<1x8x128xf32>
    %5 = vector.shape_cast %4 : vector<1x8x128xf32> to vector<8x128xf32>
    %6 = arith.truncf %1 : vector<8x128xf32> to vector<8x128xbf16>
    %c0_8 = arith.constant 0 : index
    %c0_9 = arith.constant 0 : index
    %7 = vector.load %arg6[%c0_8, %c0_9] : memref<128x128xbf16, #tpu.memory_space<vmem>>, vector<128x128xbf16>
    %cst = arith.constant dense<0.000000e+00> : vector<8x128xf32>
    %8 = tpu.matmul %6, %7, %cst {dimension_numbers = #tpu.dot_dimension_numbers<[1], [0], [0], [1], [0, 0, 1, 1], [], []>} : vector<8x128xbf16>, vector<128x128xbf16>, vector<8x128xf32> -> vector<8x128xf32>
    %c0_10 = arith.constant 0 : index
    %c0_11 = arith.constant 0 : index
    %9 = vector.load %arg7[%c0_10, %c0_11] : memref<1x128xf32, #tpu.memory_space<vmem>>, vector<1x128xf32>
    %10 = vector.broadcast %9 : vector<1x128xf32> to vector<8x128xf32>
    %11 = arith.addf %8, %10 : vector<8x128xf32>
    %cst_12 = arith.constant 0.000000e+00 : f32
    %12 = vector.broadcast %cst_12 : f32 to vector<8x128xf32>
    %13 = arith.maximumf %11, %12 : vector<8x128xf32>
    %14 = arith.truncf %13 : vector<8x128xf32> to vector<8x128xbf16>
    %c0_13 = arith.constant 0 : index
    %c0_14 = arith.constant 0 : index
    %15 = vector.load %arg8[%c0_13, %c0_14] : memref<128x32xbf16, #tpu.memory_space<vmem>>, vector<128x32xbf16>
    %cst_15 = arith.constant dense<0.000000e+00> : vector<8x32xf32>
    %16 = tpu.matmul %14, %15, %cst_15 {dimension_numbers = #tpu.dot_dimension_numbers<[1], [0], [0], [1], [0, 0, 1, 1], [], []>} : vector<8x128xbf16>, vector<128x32xbf16>, vector<8x32xf32> -> vector<8x32xf32>
    %c0_16 = arith.constant 0 : index
    %c0_17 = arith.constant 0 : index
    %17 = vector.load %arg9[%c0_16, %c0_17] : memref<1x32xf32, #tpu.memory_space<vmem>>, vector<1x32xf32>
    %18 = vector.broadcast %17 : vector<1x32xf32> to vector<8x32xf32>
    %19 = arith.addf %16, %18 : vector<8x32xf32>
    %20 = arith.truncf %3 : vector<8x128xf32> to vector<8x128xbf16>
    %c0_18 = arith.constant 0 : index
    %c0_19 = arith.constant 0 : index
    %21 = vector.load %arg10[%c0_18, %c0_19] : memref<128x128xbf16, #tpu.memory_space<vmem>>, vector<128x128xbf16>
    %cst_20 = arith.constant dense<0.000000e+00> : vector<8x128xf32>
    %22 = tpu.matmul %20, %21, %cst_20 {dimension_numbers = #tpu.dot_dimension_numbers<[1], [0], [0], [1], [0, 0, 1, 1], [], []>} : vector<8x128xbf16>, vector<128x128xbf16>, vector<8x128xf32> -> vector<8x128xf32>
    %c0_21 = arith.constant 0 : index
    %c0_22 = arith.constant 0 : index
    %23 = vector.load %arg11[%c0_21, %c0_22] : memref<1x128xf32, #tpu.memory_space<vmem>>, vector<1x128xf32>
    %24 = vector.broadcast %23 : vector<1x128xf32> to vector<8x128xf32>
    %25 = arith.addf %22, %24 : vector<8x128xf32>
    %cst_23 = arith.constant 0.000000e+00 : f32
    %26 = vector.broadcast %cst_23 : f32 to vector<8x128xf32>
    %27 = arith.maximumf %25, %26 : vector<8x128xf32>
    %28 = arith.truncf %27 : vector<8x128xf32> to vector<8x128xbf16>
    %c0_24 = arith.constant 0 : index
    %c0_25 = arith.constant 0 : index
    %29 = vector.load %arg12[%c0_24, %c0_25] : memref<128x32xbf16, #tpu.memory_space<vmem>>, vector<128x32xbf16>
    %cst_26 = arith.constant dense<0.000000e+00> : vector<8x32xf32>
    %30 = tpu.matmul %28, %29, %cst_26 {dimension_numbers = #tpu.dot_dimension_numbers<[1], [0], [0], [1], [0, 0, 1, 1], [], []>} : vector<8x128xbf16>, vector<128x32xbf16>, vector<8x32xf32> -> vector<8x32xf32>
    %c0_27 = arith.constant 0 : index
    %c0_28 = arith.constant 0 : index
    %31 = vector.load %arg13[%c0_27, %c0_28] : memref<1x32xf32, #tpu.memory_space<vmem>>, vector<1x32xf32>
    %32 = vector.broadcast %31 : vector<1x32xf32> to vector<8x32xf32>
    %33 = arith.addf %30, %32 : vector<8x32xf32>
    %34 = arith.truncf %5 : vector<8x128xf32> to vector<8x128xbf16>
    %c0_29 = arith.constant 0 : index
    %c0_30 = arith.constant 0 : index
    %35 = vector.load %arg14[%c0_29, %c0_30] : memref<128x32xbf16, #tpu.memory_space<vmem>>, vector<128x32xbf16>
    %cst_31 = arith.constant dense<0.000000e+00> : vector<8x32xf32>
    %36 = tpu.matmul %34, %35, %cst_31 {dimension_numbers = #tpu.dot_dimension_numbers<[1], [0], [0], [1], [0, 0, 1, 1], [], []>} : vector<8x128xbf16>, vector<128x32xbf16>, vector<8x32xf32> -> vector<8x32xf32>
    %c0_32 = arith.constant 0 : index
    %c0_33 = arith.constant 0 : index
    %37 = vector.load %arg15[%c0_32, %c0_33] : memref<1x32xf32, #tpu.memory_space<vmem>>, vector<1x32xf32>
    %38 = vector.broadcast %37 : vector<1x32xf32> to vector<8x32xf32>
    %39 = arith.addf %36, %38 : vector<8x32xf32>
    %cst_34 = arith.constant 0.000000e+00 : f32
    %40 = vector.broadcast %cst_34 : f32 to vector<8x32xf32>
    %41 = arith.maximumf %39, %40 : vector<8x32xf32>
    %42 = arith.truncf %19 : vector<8x32xf32> to vector<8x32xbf16>
    %c0_35 = arith.constant 0 : index
    %c0_36 = arith.constant 0 : index
    %43 = vector.load %arg16[%c0_35, %c0_36] : memref<32x32xbf16, #tpu.memory_space<vmem>>, vector<32x32xbf16>
    %cst_37 = arith.constant dense<0.000000e+00> : vector<8x32xf32>
    %44 = tpu.matmul %42, %43, %cst_37 {dimension_numbers = #tpu.dot_dimension_numbers<[1], [0], [0], [1], [0, 0, 1, 1], [], []>} : vector<8x32xbf16>, vector<32x32xbf16>, vector<8x32xf32> -> vector<8x32xf32>
    %45 = arith.truncf %33 : vector<8x32xf32> to vector<8x32xbf16>
    %c0_38 = arith.constant 0 : index
    %c0_39 = arith.constant 0 : index
    %46 = vector.load %arg17[%c0_38, %c0_39] : memref<32x32xbf16, #tpu.memory_space<vmem>>, vector<32x32xbf16>
    %cst_40 = arith.constant dense<0.000000e+00> : vector<8x32xf32>
    %47 = tpu.matmul %45, %46, %cst_40 {dimension_numbers = #tpu.dot_dimension_numbers<[1], [0], [0], [1], [0, 0, 1, 1], [], []>} : vector<8x32xbf16>, vector<32x32xbf16>, vector<8x32xf32> -> vector<8x32xf32>
    %48 = arith.addf %44, %47 : vector<8x32xf32>
    %49 = arith.truncf %41 : vector<8x32xf32> to vector<8x32xbf16>
    %c0_41 = arith.constant 0 : index
    %c0_42 = arith.constant 0 : index
    %50 = vector.load %arg18[%c0_41, %c0_42] : memref<32x32xbf16, #tpu.memory_space<vmem>>, vector<32x32xbf16>
    %cst_43 = arith.constant dense<0.000000e+00> : vector<8x32xf32>
    %51 = tpu.matmul %49, %50, %cst_43 {dimension_numbers = #tpu.dot_dimension_numbers<[1], [0], [0], [1], [0, 0, 1, 1], [], []>} : vector<8x32xbf16>, vector<32x32xbf16>, vector<8x32xf32> -> vector<8x32xf32>
    %52 = arith.addf %48, %51 : vector<8x32xf32>
    %c0_44 = arith.constant 0 : index
    %c0_45 = arith.constant 0 : index
    %53 = vector.load %arg19[%c0_44, %c0_45] : memref<1x32xf32, #tpu.memory_space<vmem>>, vector<1x32xf32>
    %54 = vector.broadcast %53 : vector<1x32xf32> to vector<8x32xf32>
    %55 = arith.addf %52, %54 : vector<8x32xf32>
    %c0_46 = arith.constant 0 : index
    %c0_47 = arith.constant 0 : index
    %56 = vector.load %arg5[%c0_46, %c0_47] : memref<8x32xf32, #tpu.memory_space<vmem>>, vector<8x32xf32>
    %57 = arith.addf %55, %56 : vector<8x32xf32>
    %58 = arith.truncf %57 : vector<8x32xf32> to vector<8x32xbf16>
    %c0_48 = arith.constant 0 : index
    %c0_49 = arith.constant 0 : index
    %c0_50 = arith.constant 0 : index
    %59 = vector.load %arg20[%c0_48, %c0_49, %c0_50] : memref<1x8x32xbf16, #tpu.memory_space<vmem>>, vector<1x8x32xbf16>
    %60 = vector.shape_cast %59 : vector<1x8x32xbf16> to vector<8x32xbf16>
    %61 = vector.shape_cast %58 : vector<8x32xbf16> to vector<1x8x32xbf16>
    tpu.vector_store %arg20[%c0_48, %c0_49, %c0_50], %61 {strides = array<i32>} : memref<1x8x32xbf16, #tpu.memory_space<vmem>>, vector<1x8x32xbf16>,
    return
  }
  func.func @transform_0(%arg0: i32, %arg1: i32) -> (i32, i32, i32) {
    %c0_i32 = arith.constant 0 : i32
    %c0_i32_0 = arith.constant 0 : i32
    return %arg1, %arg0, %c0_i32 : i32, i32, i32
  }
  func.func @transform_1(%arg0: i32, %arg1: i32) -> (i32, i32, i32) {
    %c0_i32 = arith.constant 0 : i32
    %c0_i32_0 = arith.constant 0 : i32
    return %arg1, %arg0, %c0_i32 : i32, i32, i32
  }
  func.func @transform_2(%arg0: i32, %arg1: i32) -> (i32, i32, i32) {
    %c0_i32 = arith.constant 0 : i32
    %c0_i32_0 = arith.constant 0 : i32
    return %arg1, %arg0, %c0_i32 : i32, i32, i32
  }
  func.func @transform_3(%arg0: i32, %arg1: i32) -> (i32, i32) {
    %c0_i32 = arith.constant 0 : i32
    %c0_i32_0 = arith.constant 0 : i32
    return %arg0, %c0_i32 : i32, i32
  }
  func.func @transform_4(%arg0: i32, %arg1: i32) -> (i32, i32) {
    %c0_i32 = arith.constant 0 : i32
    %c0_i32_0 = arith.constant 0 : i32
    %c0_i32_1 = arith.constant 0 : i32
    return %c0_i32, %c0_i32_0 : i32, i32
  }
  func.func @transform_5(%arg0: i32, %arg1: i32) -> (i32, i32) {
    %c0_i32 = arith.constant 0 : i32
    %c0_i32_0 = arith.constant 0 : i32
    %c0_i32_1 = arith.constant 0 : i32
    return %c0_i32, %c0_i32_0 : i32, i32
  }
  func.func @transform_6(%arg0: i32, %arg1: i32) -> (i32, i32) {
    %c0_i32 = arith.constant 0 : i32
    %c0_i32_0 = arith.constant 0 : i32
    %c0_i32_1 = arith.constant 0 : i32
    return %c0_i32, %c0_i32_0 : i32, i32
  }
  func.func @transform_7(%arg0: i32, %arg1: i32) -> (i32, i32) {
    %c0_i32 = arith.constant 0 : i32
    %c0_i32_0 = arith.constant 0 : i32
    %c0_i32_1 = arith.constant 0 : i32
    return %c0_i32, %c0_i32_0 : i32, i32
  }
  func.func @transform_8(%arg0: i32, %arg1: i32) -> (i32, i32) {
    %c0_i32 = arith.constant 0 : i32
    %c0_i32_0 = arith.constant 0 : i32
    %c0_i32_1 = arith.constant 0 : i32
    return %c0_i32, %c0_i32_0 : i32, i32
  }
  func.func @transform_9(%arg0: i32, %arg1: i32) -> (i32, i32) {
    %c0_i32 = arith.constant 0 : i32
    %c0_i32_0 = arith.constant 0 : i32
    %c0_i32_1 = arith.constant 0 : i32
    return %c0_i32, %c0_i32_0 : i32, i32
  }
  func.func @transform_10(%arg0: i32, %arg1: i32) -> (i32, i32) {
    %c0_i32 = arith.constant 0 : i32
    %c0_i32_0 = arith.constant 0 : i32
    %c0_i32_1 = arith.constant 0 : i32
    return %c0_i32, %c0_i32_0 : i32, i32
  }
  func.func @transform_11(%arg0: i32, %arg1: i32) -> (i32, i32) {
    %c0_i32 = arith.constant 0 : i32
    %c0_i32_0 = arith.constant 0 : i32
    %c0_i32_1 = arith.constant 0 : i32
    return %c0_i32, %c0_i32_0 : i32, i32
  }
  func.func @transform_12(%arg0: i32, %arg1: i32) -> (i32, i32) {
    %c0_i32 = arith.constant 0 : i32
    %c0_i32_0 = arith.constant 0 : i32
    %c0_i32_1 = arith.constant 0 : i32
    return %c0_i32, %c0_i32_0 : i32, i32
  }
  func.func @transform_13(%arg0: i32, %arg1: i32) -> (i32, i32) {
    %c0_i32 = arith.constant 0 : i32
    %c0_i32_0 = arith.constant 0 : i32
    %c0_i32_1 = arith.constant 0 : i32
    return %c0_i32, %c0_i32_0 : i32, i32
  }
  func.func @transform_14(%arg0: i32, %arg1: i32) -> (i32, i32) {
    %c0_i32 = arith.constant 0 : i32
    %c0_i32_0 = arith.constant 0 : i32
    %c0_i32_1 = arith.constant 0 : i32
    return %c0_i32, %c0_i32_0 : i32, i32
  }
  func.func @transform_15(%arg0: i32, %arg1: i32) -> (i32, i32) {
    %c0_i32 = arith.constant 0 : i32
    %c0_i32_0 = arith.constant 0 : i32
    %c0_i32_1 = arith.constant 0 : i32
    return %c0_i32, %c0_i32_0 : i32, i32
  }
  func.func @transform_16(%arg0: i32, %arg1: i32) -> (i32, i32) {
    %c0_i32 = arith.constant 0 : i32
    %c0_i32_0 = arith.constant 0 : i32
    %c0_i32_1 = arith.constant 0 : i32
    return %c0_i32, %c0_i32_0 : i32, i32
  }
  func.func @transform_17(%arg0: i32, %arg1: i32) -> (i32, i32) {
    %c0_i32 = arith.constant 0 : i32
    %c0_i32_0 = arith.constant 0 : i32
    %c0_i32_1 = arith.constant 0 : i32
    return %c0_i32, %c0_i32_0 : i32, i32
  }
  func.func @transform_18(%arg0: i32, %arg1: i32) -> (i32, i32, i32) {
    %c0_i32 = arith.constant 0 : i32
    %c0_i32_0 = arith.constant 0 : i32
    return %arg1, %arg0, %c0_i32 : i32, i32, i32
  }
}

</mosaic_0001>

<llo_original>
// kernel: tpu_custom_call.1
$region0: #{tpu_custom_call.1}
  #allocation0 [shape = 'u32[]', space=smem, size = 0x4, offset = 0x4, fixed_abs, tag = 'smem constant byte address 0x4 - core index']
  #allocation1 [shape = 'u32[144,128]{1,0:T(1,128)}', space=vmem, size = 0x12000, scoped, tag = 'internal scratch']
  %s0 = inlined_call_operand.vmem [shape: f32[2,8,128], index: 0, kind: input, shape index: {}]
  %s1 = inlined_call_operand.vmem [shape: f32[2,8,128], index: 1, kind: input, shape index: {}]
  %s2 = inlined_call_operand.vmem [shape: f32[2,8,128], index: 2, kind: input, shape index: {}]
  %s3 = inlined_call_operand.hbm [shape: f32[8,32], index: 3, kind: input, shape index: {}]
  %s4 = inlined_call_operand.vmem [shape: bf16[128,128], index: 4, kind: input, shape index: {}]
  %s5 = inlined_call_operand.vmem [shape: f32[1,128], index: 5, kind: input, shape index: {}]
  %s6 = inlined_call_operand.vmem [shape: bf16[128,32], index: 6, kind: input, shape index: {}]
  %s7 = inlined_call_operand.vmem [shape: f32[1,32], index: 7, kind: input, shape index: {}]
  %s8 = inlined_call_operand.vmem [shape: bf16[128,128], index: 8, kind: input, shape index: {}]
  %s9 = inlined_call_operand.hbm [shape: f32[1,128], index: 9, kind: input, shape index: {}]
  %s10 = inlined_call_operand.vmem [shape: bf16[128,32], index: 10, kind: input, shape index: {}]
  %s11 = inlined_call_operand.hbm [shape: f32[1,32], index: 11, kind: input, shape index: {}]
  %s12 = inlined_call_operand.vmem [shape: bf16[128,32], index: 12, kind: input, shape index: {}]
  %s13 = inlined_call_operand.vmem [shape: f32[1,32], index: 13, kind: input, shape index: {}]
  %s14 = inlined_call_operand.vmem [shape: bf16[32,32], index: 14, kind: input, shape index: {}]
  %s15 = inlined_call_operand.vmem [shape: bf16[32,32], index: 15, kind: input, shape index: {}]
  %s16 = inlined_call_operand.vmem [shape: bf16[32,32], index: 16, kind: input, shape index: {}]
  %s17 = inlined_call_operand.vmem [shape: f32[1,32], index: 17, kind: input, shape index: {}]
  %s18 = inlined_call_operand.hbm [shape: bf16[2,8,32], index: 18, kind: output, shape index: {}]
  %s19 = sld [smem:[#allocation0]]
  $region117: #{tpu_custom_call.1} parent=0
    _
  %s21 = ssub.s32 1, %s19
  %s22 = scalar_select 0, %s21, %s19
  $region1: #{tpu_custom_call.1} parent=0
    #allocation2 [shape = 'u8[4096]{0}', space=vmem, size = 0x1000, scoped, tag = 'input window, operand 3, single buffered']
    #allocation3 [shape = 's32[2]{0}', space=sflag, size = 0x8, scoped, tag = 'scoped memory for tpu_custom_call.1']
    #allocation4 [shape = 's32[2]{0}', space=sflag, size = 0x8, scoped, tag = 'scoped memory for tpu_custom_call.1']
    #allocation5 [shape = 'u8[512]{0}', space=vmem, size = 0x400, scoped, tag = 'input window, operand 9, single buffered']
    #allocation6 [shape = 's32[1]{0}', space=sflag, size = 0x4, scoped, tag = 'scoped memory for tpu_custom_call.1']
    #allocation7 [shape = 'u8[512]{0}', space=vmem, size = 0x400, scoped, tag = 'input window, operand 11, single buffered']
    #allocation8 [shape = 'u8[4096]{0}', space=vmem, size = 0x1000, scoped, tag = 'output window, operand 0']
    %23 = vsyncpa [#allocation3], 0
    %24 = vsyncpa [#allocation6], 0
    %25 = vsyncpa [#allocation4], 0
    %s26 = scalar_lea.sflag [#allocation4], 1
    %27 = vsyncpa %s26, 0
    loop: start=0, step=1, limit=4
    $region2: #{tpu_custom_call.1} parent=1 // loop_pre_header
      _
    $region3: #{tpu_custom_call.1} parent=1 // loop_header
      %s29 = sphi 0, %s33
      %p30 = scmp.ge.s32.totalorder %s29, 4
      %s36 = sphi 0, %s48
      %s37 = sphi 0, %s44
      %s38 = sphi 0, %s36
      %s39 = sphi 0, %s37
      %s40 = sphi 0, %s38
      %s41 = sphi 0, %s39
      %s53 = sphi 0, %s55
      %s56 = sphi 0, %s53
      %s57 = sphi 0, %s56
      %s73 = sphi 0, %s57
      %s81 = sphi 0, %s83
      %s84 = sphi 0, %s81
      %s85 = sphi 0, %s84
      %s101 = sphi 0, %s85
      %s109 = sphi 0, %s111
      %s112 = sphi 0, %s109
      %s113 = sphi 0, %s112
      %s129 = sphi 0, %s113
      %s135 = sphi 0, %s137
      %s138 = sphi 0, %s135
      %s139 = sphi 0, %s138
      %s155 = sphi 0, %s139
      %s159 = sphi 0, %s159
      %s161 = sphi 0, %s159
      %s162 = sphi 0, %s161
      %s176 = sphi 0, %s162
      %s180 = sphi 0, %s180
      %s182 = sphi 0, %s180
      %s183 = sphi 0, %s182
      %s197 = sphi 0, %s183
      %s201 = sphi 0, %s201
      %s203 = sphi 0, %s201
      %s204 = sphi 0, %s203
      %s218 = sphi 0, %s204
      %s222 = sphi 0, %s222
      %s224 = sphi 0, %s222
      %s225 = sphi 0, %s224
      %s239 = sphi 0, %s225
      %s243 = sphi 0, %s243
      %s245 = sphi 0, %s243
      %s246 = sphi 0, %s245
      %s260 = sphi 0, %s246
      %s264 = sphi 0, %s264
      %s266 = sphi 0, %s264
      %s267 = sphi 0, %s266
      %s281 = sphi 0, %s267
      %s285 = sphi 0, %s285
      %s287 = sphi 0, %s285
      %s288 = sphi 0, %s287
      %s302 = sphi 0, %s288
      %s306 = sphi 0, %s306
      %s308 = sphi 0, %s306
      %s309 = sphi 0, %s308
      %s323 = sphi 0, %s309
      %s327 = sphi 0, %s327
      %s329 = sphi 0, %s327
      %s330 = sphi 0, %s329
      %s344 = sphi 0, %s330
      %s348 = sphi 0, %s348
      %s350 = sphi 0, %s348
      %s351 = sphi 0, %s350
      %s365 = sphi 0, %s351
      %s369 = sphi 0, %s369
      %s371 = sphi 0, %s369
      %s372 = sphi 0, %s371
      %s386 = sphi 0, %s372
      %s390 = sphi 0, %s390
      %s392 = sphi 0, %s390
      %s393 = sphi 0, %s392
      %s407 = sphi 0, %s393
      %s411 = sphi 0, %s411
      %s413 = sphi 0, %s411
      %s414 = sphi 0, %s413
      %s428 = sphi 0, %s414
      %s432 = sphi 0, %s432
      %s434 = sphi 0, %s432
      %s435 = sphi 0, %s434
      %s449 = sphi 0, %s435
      %s457 = sphi 0, %s459
      %s460 = sphi 0, %s457
      %s461 = sphi 0, %s460
      %s477 = sphi 0, %s461
    $region4: #{tpu_custom_call.1} parent=1 // loop_header_branch
      %32 = sbr.rel (%p30) target = $region8
    $region5: #{tpu_custom_call.1} parent=1 // loop_body
      %s34 = ssub.s32 %s29, 1
      %s35 = ssub.s32 %s29, 2
      %s42 = sadd.s32 1, %s37
      %p43 = scmp.ge.s32.totalorder %s42, 2
      %s44 = scalar_select %p43, 0, %s42
      %s45 = sadd.s32 1, %s36
      %s46 = scalar_select %p43, %s45, %s36
      %p47 = scmp.ge.s32.totalorder %s46, 1
      %s48 = scalar_select %p47, 0, %s46
      %s49 = ssub.s32 %s37, %s44
      %s50 = ssub.s32 %s36, %s48
      %s51 = sor.u32 %s49, %s50
      %p52 = scmp.eq.s32.totalorder %s51, 0
      %s54 = sadd.s32 %s53, 1
      %s55 = scalar_select %p52, %s53, %s54
      %p58 = pneg %p52
      %p59 = scmp.eq.s32.totalorder %s29, 1
      %p60 = por %p58, %p59
      %p61 = scmp.ne.s32.totalorder %s53, %s56
      %p62 = scmp.eq.s32.totalorder %s29, 0
      %p63 = por %p61, %p62
      %p64 = scmp.ne.s32.totalorder %s53, %s56
      %p65 = scmp.eq.s32.totalorder %s34, 1
      %p66 = por %p64, %p65
      %p67 = scmp.ne.s32.totalorder %s56, %s57
      %p68 = scmp.eq.s32.totalorder %s34, 0
      %p69 = por %p67, %p68
      %p70 = scmp.ne.s32.totalorder %s56, %s57
      %p71 = scmp.eq.s32.totalorder %s35, 1
      %p72 = por %p70, %p71
      %p74 = scmp.ne.s32.totalorder %s57, %s73
      %p75 = scmp.eq.s32.totalorder %s35, 0
      %p76 = por %p74, %p75
      %s77 = ssub.s32 %s37, %s44
      %s78 = ssub.s32 %s36, %s48
      %s79 = sor.u32 %s77, %s78
      %p80 = scmp.eq.s32.totalorder %s79, 0
      %s82 = sadd.s32 %s81, 1
      %s83 = scalar_select %p80, %s81, %s82
      %p86 = pneg %p80
      %p87 = scmp.eq.s32.totalorder %s29, 1
      %p88 = por %p86, %p87
      %p89 = scmp.ne.s32.totalorder %s81, %s84
      %p90 = scmp.eq.s32.totalorder %s29, 0
      %p91 = por %p89, %p90
      %p92 = scmp.ne.s32.totalorder %s81, %s84
      %p93 = scmp.eq.s32.totalorder %s34, 1
      %p94 = por %p92, %p93
      %p95 = scmp.ne.s32.totalorder %s84, %s85
      %p96 = scmp.eq.s32.totalorder %s34, 0
      %p97 = por %p95, %p96
      %p98 = scmp.ne.s32.totalorder %s84, %s85
      %p99 = scmp.eq.s32.totalorder %s35, 1
      %p100 = por %p98, %p99
      %p102 = scmp.ne.s32.totalorder %s85, %s101
      %p103 = scmp.eq.s32.totalorder %s35, 0
      %p104 = por %p102, %p103
      %s105 = ssub.s32 %s37, %s44
      %s106 = ssub.s32 %s36, %s48
      %s107 = sor.u32 %s105, %s106
      %p108 = scmp.eq.s32.totalorder %s107, 0
      %s110 = sadd.s32 %s109, 1
      %s111 = scalar_select %p108, %s109, %s110
      %p114 = pneg %p108
      %p115 = scmp.eq.s32.totalorder %s29, 1
      %p116 = por %p114, %p115
      %p117 = scmp.ne.s32.totalorder %s109, %s112
      %p118 = scmp.eq.s32.totalorder %s29, 0
      %p119 = por %p117, %p118
      %p120 = scmp.ne.s32.totalorder %s109, %s112
      %p121 = scmp.eq.s32.totalorder %s34, 1
      %p122 = por %p120, %p121
      %p123 = scmp.ne.s32.totalorder %s112, %s113
      %p124 = scmp.eq.s32.totalorder %s34, 0
      %p125 = por %p123, %p124
      %p126 = scmp.ne.s32.totalorder %s112, %s113
      %p127 = scmp.eq.s32.totalorder %s35, 1
      %p128 = por %p126, %p127
      %p130 = scmp.ne.s32.totalorder %s113, %s129
      %p131 = scmp.eq.s32.totalorder %s35, 0
      %p132 = por %p130, %p131
      %s133 = ssub.s32 %s36, %s48
      %p134 = scmp.eq.s32.totalorder %s133, 0
      %s136 = sadd.s32 %s135, 1
      %s137 = scalar_select %p134, %s135, %s136
      %p140 = pneg %p134
      %p141 = scmp.eq.s32.totalorder %s29, 1
      %p142 = por %p140, %p141
      %p143 = scmp.ne.s32.totalorder %s135, %s138
      %p144 = scmp.eq.s32.totalorder %s29, 0
      %p145 = por %p143, %p144
      %p146 = scmp.ne.s32.totalorder %s135, %s138
      %p147 = scmp.eq.s32.totalorder %s34, 1
      %p148 = por %p146, %p147
      %p149 = scmp.ne.s32.totalorder %s138, %s139
      %p150 = scmp.eq.s32.totalorder %s34, 0
      %p151 = por %p149, %p150
      %p152 = scmp.ne.s32.totalorder %s138, %s139
      %p153 = scmp.eq.s32.totalorder %s35, 1
      %p154 = por %p152, %p153
      %p156 = scmp.ne.s32.totalorder %s139, %s155
      %p157 = scmp.eq.s32.totalorder %s35, 0
      %p158 = por %p156, %p157
      %s160 = sadd.s32 %s159, 1
      %p163 = scmp.eq.s32.totalorder %s29, 1
      %p164 = scmp.ne.s32.totalorder %s159, %s161
      %p165 = scmp.eq.s32.totalorder %s29, 0
      %p166 = por %p164, %p165
      %p167 = scmp.ne.s32.totalorder %s159, %s161
      %p168 = scmp.eq.s32.totalorder %s34, 1
      %p169 = por %p167, %p168
      %p170 = scmp.ne.s32.totalorder %s161, %s162
      %p171 = scmp.eq.s32.totalorder %s34, 0
      %p172 = por %p170, %p171
      %p173 = scmp.ne.s32.totalorder %s161, %s162
      %p174 = scmp.eq.s32.totalorder %s35, 1
      %p175 = por %p173, %p174
      %p177 = scmp.ne.s32.totalorder %s162, %s176
      %p178 = scmp.eq.s32.totalorder %s35, 0
      %p179 = por %p177, %p178
      %s181 = sadd.s32 %s180, 1
      %p184 = scmp.eq.s32.totalorder %s29, 1
      %p185 = scmp.ne.s32.totalorder %s180, %s182
      %p186 = scmp.eq.s32.totalorder %s29, 0
      %p187 = por %p185, %p186
      %p188 = scmp.ne.s32.totalorder %s180, %s182
      %p189 = scmp.eq.s32.totalorder %s34, 1
      %p190 = por %p188, %p189
      %p191 = scmp.ne.s32.totalorder %s182, %s183
      %p192 = scmp.eq.s32.totalorder %s34, 0
      %p193 = por %p191, %p192
      %p194 = scmp.ne.s32.totalorder %s182, %s183
      %p195 = scmp.eq.s32.totalorder %s35, 1
      %p196 = por %p194, %p195
      %p198 = scmp.ne.s32.totalorder %s183, %s197
      %p199 = scmp.eq.s32.totalorder %s35, 0
      %p200 = por %p198, %p199
      %s202 = sadd.s32 %s201, 1
      %p205 = scmp.eq.s32.totalorder %s29, 1
      %p206 = scmp.ne.s32.totalorder %s201, %s203
      %p207 = scmp.eq.s32.totalorder %s29, 0
      %p208 = por %p206, %p207
      %p209 = scmp.ne.s32.totalorder %s201, %s203
      %p210 = scmp.eq.s32.totalorder %s34, 1
      %p211 = por %p209, %p210
      %p212 = scmp.ne.s32.totalorder %s203, %s204
      %p213 = scmp.eq.s32.totalorder %s34, 0
      %p214 = por %p212, %p213
      %p215 = scmp.ne.s32.totalorder %s203, %s204
      %p216 = scmp.eq.s32.totalorder %s35, 1
      %p217 = por %p215, %p216
      %p219 = scmp.ne.s32.totalorder %s204, %s218
      %p220 = scmp.eq.s32.totalorder %s35, 0
      %p221 = por %p219, %p220
      %s223 = sadd.s32 %s222, 1
      %p226 = scmp.eq.s32.totalorder %s29, 1
      %p227 = scmp.ne.s32.totalorder %s222, %s224
      %p228 = scmp.eq.s32.totalorder %s29, 0
      %p229 = por %p227, %p228
      %p230 = scmp.ne.s32.totalorder %s222, %s224
      %p231 = scmp.eq.s32.totalorder %s34, 1
      %p232 = por %p230, %p231
      %p233 = scmp.ne.s32.totalorder %s224, %s225
      %p234 = scmp.eq.s32.totalorder %s34, 0
      %p235 = por %p233, %p234
      %p236 = scmp.ne.s32.totalorder %s224, %s225
      %p237 = scmp.eq.s32.totalorder %s35, 1
      %p238 = por %p236, %p237
      %p240 = scmp.ne.s32.totalorder %s225, %s239
      %p241 = scmp.eq.s32.totalorder %s35, 0
      %p242 = por %p240, %p241
      %s244 = sadd.s32 %s243, 1
      %p247 = scmp.eq.s32.totalorder %s29, 1
      %p248 = scmp.ne.s32.totalorder %s243, %s245
      %p249 = scmp.eq.s32.totalorder %s29, 0
      %p250 = por %p248, %p249
      %p251 = scmp.ne.s32.totalorder %s243, %s245
      %p252 = scmp.eq.s32.totalorder %s34, 1
      %p253 = por %p251, %p252
      %p254 = scmp.ne.s32.totalorder %s245, %s246
      %p255 = scmp.eq.s32.totalorder %s34, 0
      %p256 = por %p254, %p255
      %p257 = scmp.ne.s32.totalorder %s245, %s246
      %p258 = scmp.eq.s32.totalorder %s35, 1
      %p259 = por %p257, %p258
      %p261 = scmp.ne.s32.totalorder %s246, %s260
      %p262 = scmp.eq.s32.totalorder %s35, 0
      %p263 = por %p261, %p262
      %s265 = sadd.s32 %s264, 1
      %p268 = scmp.eq.s32.totalorder %s29, 1
      %p269 = scmp.ne.s32.totalorder %s264, %s266
      %p270 = scmp.eq.s32.totalorder %s29, 0
      %p271 = por %p269, %p270
      %p272 = scmp.ne.s32.totalorder %s264, %s266
      %p273 = scmp.eq.s32.totalorder %s34, 1
      %p274 = por %p272, %p273
      %p275 = scmp.ne.s32.totalorder %s266, %s267
      %p276 = scmp.eq.s32.totalorder %s34, 0
      %p277 = por %p275, %p276
      %p278 = scmp.ne.s32.totalorder %s266, %s267
      %p279 = scmp.eq.s32.totalorder %s35, 1
      %p280 = por %p278, %p279
      %p282 = scmp.ne.s32.totalorder %s267, %s281
      %p283 = scmp.eq.s32.totalorder %s35, 0
      %p284 = por %p282, %p283
      %s286 = sadd.s32 %s285, 1
      %p289 = scmp.eq.s32.totalorder %s29, 1
      %p290 = scmp.ne.s32.totalorder %s285, %s287
      %p291 = scmp.eq.s32.totalorder %s29, 0
      %p292 = por %p290, %p291
      %p293 = scmp.ne.s32.totalorder %s285, %s287
      %p294 = scmp.eq.s32.totalorder %s34, 1
      %p295 = por %p293, %p294
      %p296 = scmp.ne.s32.totalorder %s287, %s288
      %p297 = scmp.eq.s32.totalorder %s34, 0
      %p298 = por %p296, %p297
      %p299 = scmp.ne.s32.totalorder %s287, %s288
      %p300 = scmp.eq.s32.totalorder %s35, 1
      %p301 = por %p299, %p300
      %p303 = scmp.ne.s32.totalorder %s288, %s302
      %p304 = scmp.eq.s32.totalorder %s35, 0
      %p305 = por %p303, %p304
      %s307 = sadd.s32 %s306, 1
      %p310 = scmp.eq.s32.totalorder %s29, 1
      %p311 = scmp.ne.s32.totalorder %s306, %s308
      %p312 = scmp.eq.s32.totalorder %s29, 0
      %p313 = por %p311, %p312
      %p314 = scmp.ne.s32.totalorder %s306, %s308
      %p315 = scmp.eq.s32.totalorder %s34, 1
      %p316 = por %p314, %p315
      %p317 = scmp.ne.s32.totalorder %s308, %s309
      %p318 = scmp.eq.s32.totalorder %s34, 0
      %p319 = por %p317, %p318
      %p320 = scmp.ne.s32.totalorder %s308, %s309
      %p321 = scmp.eq.s32.totalorder %s35, 1
      %p322 = por %p320, %p321
      %p324 = scmp.ne.s32.totalorder %s309, %s323
      %p325 = scmp.eq.s32.totalorder %s35, 0
      %p326 = por %p324, %p325
      %s328 = sadd.s32 %s327, 1
      %p331 = scmp.eq.s32.totalorder %s29, 1
      %p332 = scmp.ne.s32.totalorder %s327, %s329
      %p333 = scmp.eq.s32.totalorder %s29, 0
      %p334 = por %p332, %p333
      %p335 = scmp.ne.s32.totalorder %s327, %s329
      %p336 = scmp.eq.s32.totalorder %s34, 1
      %p337 = por %p335, %p336
      %p338 = scmp.ne.s32.totalorder %s329, %s330
      %p339 = scmp.eq.s32.totalorder %s34, 0
      %p340 = por %p338, %p339
      %p341 = scmp.ne.s32.totalorder %s329, %s330
      %p342 = scmp.eq.s32.totalorder %s35, 1
      %p343 = por %p341, %p342
      %p345 = scmp.ne.s32.totalorder %s330, %s344
      %p346 = scmp.eq.s32.totalorder %s35, 0
      %p347 = por %p345, %p346
      %s349 = sadd.s32 %s348, 1
      %p352 = scmp.eq.s32.totalorder %s29, 1
      %p353 = scmp.ne.s32.totalorder %s348, %s350
      %p354 = scmp.eq.s32.totalorder %s29, 0
      %p355 = por %p353, %p354
      %p356 = scmp.ne.s32.totalorder %s348, %s350
      %p357 = scmp.eq.s32.totalorder %s34, 1
      %p358 = por %p356, %p357
      %p359 = scmp.ne.s32.totalorder %s350, %s351
      %p360 = scmp.eq.s32.totalorder %s34, 0
      %p361 = por %p359, %p360
      %p362 = scmp.ne.s32.totalorder %s350, %s351
      %p363 = scmp.eq.s32.totalorder %s35, 1
      %p364 = por %p362, %p363
      %p366 = scmp.ne.s32.totalorder %s351, %s365
      %p367 = scmp.eq.s32.totalorder %s35, 0
      %p368 = por %p366, %p367
      %s370 = sadd.s32 %s369, 1
      %p373 = scmp.eq.s32.totalorder %s29, 1
      %p374 = scmp.ne.s32.totalorder %s369, %s371
      %p375 = scmp.eq.s32.totalorder %s29, 0
      %p376 = por %p374, %p375
      %p377 = scmp.ne.s32.totalorder %s369, %s371
      %p378 = scmp.eq.s32.totalorder %s34, 1
      %p379 = por %p377, %p378
      %p380 = scmp.ne.s32.totalorder %s371, %s372
      %p381 = scmp.eq.s32.totalorder %s34, 0
      %p382 = por %p380, %p381
      %p383 = scmp.ne.s32.totalorder %s371, %s372
      %p384 = scmp.eq.s32.totalorder %s35, 1
      %p385 = por %p383, %p384
      %p387 = scmp.ne.s32.totalorder %s372, %s386
      %p388 = scmp.eq.s32.totalorder %s35, 0
      %p389 = por %p387, %p388
      %s391 = sadd.s32 %s390, 1
      %p394 = scmp.eq.s32.totalorder %s29, 1
      %p395 = scmp.ne.s32.totalorder %s390, %s392
      %p396 = scmp.eq.s32.totalorder %s29, 0
      %p397 = por %p395, %p396
      %p398 = scmp.ne.s32.totalorder %s390, %s392
      %p399 = scmp.eq.s32.totalorder %s34, 1
      %p400 = por %p398, %p399
      %p401 = scmp.ne.s32.totalorder %s392, %s393
      %p402 = scmp.eq.s32.totalorder %s34, 0
      %p403 = por %p401, %p402
      %p404 = scmp.ne.s32.totalorder %s392, %s393
      %p405 = scmp.eq.s32.totalorder %s35, 1
      %p406 = por %p404, %p405
      %p408 = scmp.ne.s32.totalorder %s393, %s407
      %p409 = scmp.eq.s32.totalorder %s35, 0
      %p410 = por %p408, %p409
      %s412 = sadd.s32 %s411, 1
      %p415 = scmp.eq.s32.totalorder %s29, 1
      %p416 = scmp.ne.s32.totalorder %s411, %s413
      %p417 = scmp.eq.s32.totalorder %s29, 0
      %p418 = por %p416, %p417
      %p419 = scmp.ne.s32.totalorder %s411, %s413
      %p420 = scmp.eq.s32.totalorder %s34, 1
      %p421 = por %p419, %p420
      %p422 = scmp.ne.s32.totalorder %s413, %s414
      %p423 = scmp.eq.s32.totalorder %s34, 0
      %p424 = por %p422, %p423
      %p425 = scmp.ne.s32.totalorder %s413, %s414
      %p426 = scmp.eq.s32.totalorder %s35, 1
      %p427 = por %p425, %p426
      %p429 = scmp.ne.s32.totalorder %s414, %s428
      %p430 = scmp.eq.s32.totalorder %s35, 0
      %p431 = por %p429, %p430
      %s433 = sadd.s32 %s432, 1
      %p436 = scmp.eq.s32.totalorder %s29, 1
      %p437 = scmp.ne.s32.totalorder %s432, %s434
      %p438 = scmp.eq.s32.totalorder %s29, 0
      %p439 = por %p437, %p438
      %p440 = scmp.ne.s32.totalorder %s432, %s434
      %p441 = scmp.eq.s32.totalorder %s34, 1
      %p442 = por %p440, %p441
      %p443 = scmp.ne.s32.totalorder %s434, %s435
      %p444 = scmp.eq.s32.totalorder %s34, 0
      %p445 = por %p443, %p444
      %p446 = scmp.ne.s32.totalorder %s434, %s435
      %p447 = scmp.eq.s32.totalorder %s35, 1
      %p448 = por %p446, %p447
      %p450 = scmp.ne.s32.totalorder %s435, %s449
      %p451 = scmp.eq.s32.totalorder %s35, 0
      %p452 = por %p450, %p451
      %s453 = ssub.s32 %s37, %s44
      %s454 = ssub.s32 %s36, %s48
      %s455 = sor.u32 %s453, %s454
      %p456 = scmp.eq.s32.totalorder %s455, 0
      %s458 = sadd.s32 %s457, 1
      %s459 = scalar_select %p456, %s457, %s458
      %p462 = pneg %p456
      %p463 = scmp.eq.s32.totalorder %s29, 1
      %p464 = por %p462, %p463
      %p465 = scmp.ne.s32.totalorder %s457, %s460
      %p466 = scmp.eq.s32.totalorder %s29, 0
      %p467 = por %p465, %p466
      %p468 = scmp.ne.s32.totalorder %s457, %s460
      %p469 = scmp.eq.s32.totalorder %s34, 1
      %p470 = por %p468, %p469
      %p471 = scmp.ne.s32.totalorder %s460, %s461
      %p472 = scmp.eq.s32.totalorder %s34, 0
      %p473 = por %p471, %p472
      %p474 = scmp.ne.s32.totalorder %s460, %s461
      %p475 = scmp.eq.s32.totalorder %s35, 1
      %p476 = por %p474, %p475
      %p478 = scmp.ne.s32.totalorder %s461, %s477
      %p479 = scmp.eq.s32.totalorder %s35, 0
      %p480 = por %p478, %p479
      %p481 = scmp.le.s32.totalorder 1, %s29
      %p482 = scmp.lt.s32.totalorder %s29, 3
      %p483 = pnand %p481, %p482
      %p484 = pneg %p483
      // Predicated region
      $region9: #{tpu_custom_call.1} parent=5 // pred_check
        _
      $region10: #{tpu_custom_call.1} parent=5 // pred_check_branch
        %486 = sbr.rel (%p483) target = $region12
      $region11: #{tpu_custom_call.1} parent=5 // pred_region
        %s487 = ssub.s32 %s29, 1
        // Predicated region
        $region13: #{tpu_custom_call.1} parent=11 // pred_check
          %p488 = pneg %p151
        $region14: #{tpu_custom_call.1} parent=11 // pred_check_branch
          %490 = sbr.rel (%p488) target = $region16
        $region15: #{tpu_custom_call.1} parent=11 // pred_region
          %s492 = ssub.s32 128, 128
          %493 = vsyncadd [#allocation3], %s492
          %s494 = smul.addr %s38, 128
          %s495 = scalar_lea.hbm %s3, %s494
          %s497 = sshll.u32 [#allocation2], 4
          %s498 = int_to_ptr.vmem [resolvable:$true] %s497
          %500 = dma.hbm_to_vmem [thread:$0]  %s495, 128, %s498, [#allocation3]
        $region16: #{tpu_custom_call.1} parent=11 // pred_fallthru
          _
        // Predicated region
        $region17: #{tpu_custom_call.1} parent=11 // pred_check
          %p501 = pneg %p172
        $region18: #{tpu_custom_call.1} parent=11 // pred_check_branch
          %503 = sbr.rel (%p501) target = $region20
        $region19: #{tpu_custom_call.1} parent=11 // pred_region
          _
        $region20: #{tpu_custom_call.1} parent=11 // pred_fallthru
          _
        // Predicated region
        $region21: #{tpu_custom_call.1} parent=11 // pred_check
          %p504 = pneg %p193
        $region22: #{tpu_custom_call.1} parent=11 // pred_check_branch
          %506 = sbr.rel (%p504) target = $region24
        $region23: #{tpu_custom_call.1} parent=11 // pred_region
          _
        $region24: #{tpu_custom_call.1} parent=11 // pred_fallthru
          _
        // Predicated region
        $region25: #{tpu_custom_call.1} parent=11 // pred_check
          %p507 = pneg %p214
        $region26: #{tpu_custom_call.1} parent=11 // pred_check_branch
          %509 = sbr.rel (%p507) target = $region28
        $region27: #{tpu_custom_call.1} parent=11 // pred_region
          _
        $region28: #{tpu_custom_call.1} parent=11 // pred_fallthru
          _
        // Predicated region
        $region29: #{tpu_custom_call.1} parent=11 // pred_check
          %p510 = pneg %p235
        $region30: #{tpu_custom_call.1} parent=11 // pred_check_branch
          %512 = sbr.rel (%p510) target = $region32
        $region31: #{tpu_custom_call.1} parent=11 // pred_region
          _
        $region32: #{tpu_custom_call.1} parent=11 // pred_fallthru
          _
        // Predicated region
        $region33: #{tpu_custom_call.1} parent=11 // pred_check
          %p513 = pneg %p256
        $region34: #{tpu_custom_call.1} parent=11 // pred_check_branch
          %515 = sbr.rel (%p513) target = $region36
        $region35: #{tpu_custom_call.1} parent=11 // pred_region
          _
        $region36: #{tpu_custom_call.1} parent=11 // pred_fallthru
          _
        // Predicated region
        $region37: #{tpu_custom_call.1} parent=11 // pred_check
          %p516 = pneg %p277
        $region38: #{tpu_custom_call.1} parent=11 // pred_check_branch
          %518 = sbr.rel (%p516) target = $region40
        $region39: #{tpu_custom_call.1} parent=11 // pred_region
          %s520 = ssub.s32 16, 16
          %521 = vsyncadd [#allocation6], %s520
          %s523 = sshll.u32 [#allocation5], 4
          %s524 = int_to_ptr.vmem [resolvable:$true] %s523
          %526 = dma.hbm_to_vmem [thread:$0]  %s9, 16, %s524, [#allocation6]
        $region40: #{tpu_custom_call.1} parent=11 // pred_fallthru
          _
        // Predicated region
        $region41: #{tpu_custom_call.1} parent=11 // pred_check
          %p527 = pneg %p298
        $region42: #{tpu_custom_call.1} parent=11 // pred_check_branch
          %529 = sbr.rel (%p527) target = $region44
        $region43: #{tpu_custom_call.1} parent=11 // pred_region
          _
        $region44: #{tpu_custom_call.1} parent=11 // pred_fallthru
          _
        // Predicated region
        $region45: #{tpu_custom_call.1} parent=11 // pred_check
          %p530 = pneg %p319
        $region46: #{tpu_custom_call.1} parent=11 // pred_check_branch
          %532 = sbr.rel (%p530) target = $region48
        $region47: #{tpu_custom_call.1} parent=11 // pred_region
          %s534 = ssub.s32 16, 16
          %535 = vsyncadd [#allocation6], %s534
          %s537 = sshll.u32 [#allocation7], 4
          %s538 = int_to_ptr.vmem [resolvable:$true] %s537
          %540 = dma.hbm_to_vmem [thread:$0]  %s11, 16, %s538, [#allocation6]
        $region48: #{tpu_custom_call.1} parent=11 // pred_fallthru
          _
        // Predicated region
        $region49: #{tpu_custom_call.1} parent=11 // pred_check
          %p541 = pneg %p340
        $region50: #{tpu_custom_call.1} parent=11 // pred_check_branch
          %543 = sbr.rel (%p541) target = $region52
        $region51: #{tpu_custom_call.1} parent=11 // pred_region
          _
        $region52: #{tpu_custom_call.1} parent=11 // pred_fallthru
          _
        // Predicated region
        $region53: #{tpu_custom_call.1} parent=11 // pred_check
          %p544 = pneg %p361
        $region54: #{tpu_custom_call.1} parent=11 // pred_check_branch
          %546 = sbr.rel (%p544) target = $region56
        $region55: #{tpu_custom_call.1} parent=11 // pred_region
          _
        $region56: #{tpu_custom_call.1} parent=11 // pred_fallthru
          _
        // Predicated region
        $region57: #{tpu_custom_call.1} parent=11 // pred_check
          %p547 = pneg %p382
        $region58: #{tpu_custom_call.1} parent=11 // pred_check_branch
          %549 = sbr.rel (%p547) target = $region60
        $region59: #{tpu_custom_call.1} parent=11 // pred_region
          _
        $region60: #{tpu_custom_call.1} parent=11 // pred_fallthru
          _
        // Predicated region
        $region61: #{tpu_custom_call.1} parent=11 // pred_check
          %p550 = pneg %p403
        $region62: #{tpu_custom_call.1} parent=11 // pred_check_branch
          %552 = sbr.rel (%p550) target = $region64
        $region63: #{tpu_custom_call.1} parent=11 // pred_region
          _
        $region64: #{tpu_custom_call.1} parent=11 // pred_fallthru
          _
        // Predicated region
        $region65: #{tpu_custom_call.1} parent=11 // pred_check
          %p553 = pneg %p424
        $region66: #{tpu_custom_call.1} parent=11 // pred_check_branch
          %555 = sbr.rel (%p553) target = $region68
        $region67: #{tpu_custom_call.1} parent=11 // pred_region
          _
        $region68: #{tpu_custom_call.1} parent=11 // pred_fallthru
          _
        // Predicated region
        $region69: #{tpu_custom_call.1} parent=11 // pred_check
          %p556 = pneg %p445
        $region70: #{tpu_custom_call.1} parent=11 // pred_check_branch
          %558 = sbr.rel (%p556) target = $region72
        $region71: #{tpu_custom_call.1} parent=11 // pred_region
          _
        $region72: #{tpu_custom_call.1} parent=11 // pred_fallthru
          _
      $region12: #{tpu_custom_call.1} parent=5 // pred_fallthru
        _
      %p559 = scmp.lt.s32.totalorder %s29, 2
      // Predicated region
      $region73: #{tpu_custom_call.1} parent=5 // pred_check
        %p560 = pneg %p559
      $region74: #{tpu_custom_call.1} parent=5 // pred_check_branch
        %562 = sbr.rel (%p560) target = $region76
      $region75: #{tpu_custom_call.1} parent=5 // pred_region
        // Predicated region
        $region77: #{tpu_custom_call.1} parent=75 // pred_check
          %p563 = pneg %p63
        $region78: #{tpu_custom_call.1} parent=75 // pred_check_branch
          %565 = sbr.rel (%p563) target = $region80
        $region79: #{tpu_custom_call.1} parent=75 // pred_region
          %p566 = scmp.lt.s32.totalorder %s37, 1
          %s567 = scalar_select %p566, %s37, 1
          %p568 = scmp.lt.s32.totalorder %s36, 0
          %s569 = scalar_select %p568, %s36, 0
          %s570 = sadd.s32 %s569, %s567
          %s571 = smul.addr %s570, 8
          %s572 = scalar_lea.vmem %s0, %s571
        $region80: #{tpu_custom_call.1} parent=75 // pred_fallthru
          _
        // Predicated region
        $region81: #{tpu_custom_call.1} parent=75 // pred_check
          %p573 = pneg %p91
        $region82: #{tpu_custom_call.1} parent=75 // pred_check_branch
          %575 = sbr.rel (%p573) target = $region84
        $region83: #{tpu_custom_call.1} parent=75 // pred_region
          %p576 = scmp.lt.s32.totalorder %s37, 1
          %s577 = scalar_select %p576, %s37, 1
          %p578 = scmp.lt.s32.totalorder %s36, 0
          %s579 = scalar_select %p578, %s36, 0
          %s580 = sadd.s32 %s579, %s577
          %s581 = smul.addr %s580, 8
          %s582 = scalar_lea.vmem %s1, %s581
        $region84: #{tpu_custom_call.1} parent=75 // pred_fallthru
          _
        // Predicated region
        $region85: #{tpu_custom_call.1} parent=75 // pred_check
          %p583 = pneg %p119
        $region86: #{tpu_custom_call.1} parent=75 // pred_check_branch
          %585 = sbr.rel (%p583) target = $region88
        $region87: #{tpu_custom_call.1} parent=75 // pred_region
          %p586 = scmp.lt.s32.totalorder %s37, 1
          %s587 = scalar_select %p586, %s37, 1
          %p588 = scmp.lt.s32.totalorder %s36, 0
          %s589 = scalar_select %p588, %s36, 0
          %s590 = sadd.s32 %s589, %s587
          %s591 = smul.addr %s590, 8
          %s592 = scalar_lea.vmem %s2, %s591
        $region88: #{tpu_custom_call.1} parent=75 // pred_fallthru
          _
      $region76: #{tpu_custom_call.1} parent=5 // pred_fallthru
        _
      %p593 = scmp.le.s32.totalorder 1, %s29
      %p594 = scmp.lt.s32.totalorder %s29, 3
      %p595 = pnand %p593, %p594
      %p596 = pneg %p595
      // Predicated region
      $region89: #{tpu_custom_call.1} parent=5 // pred_check
        _
      $region90: #{tpu_custom_call.1} parent=5 // pred_check_branch
        %598 = sbr.rel (%p595) target = $region92
      $region91: #{tpu_custom_call.1} parent=5 // pred_region
        %s599 = ssub.s32 %s29, 1
        // Predicated region
        $region93: #{tpu_custom_call.1} parent=91 // pred_check
          %p600 = pneg %p151
        $region94: #{tpu_custom_call.1} parent=91 // pred_check_branch
          %602 = sbr.rel (%p600) target = $region96
        $region95: #{tpu_custom_call.1} parent=91 // pred_region
          %603 = dma.done [#allocation3], 128
        $region96: #{tpu_custom_call.1} parent=91 // pred_fallthru
          _
        // Predicated region
        $region97: #{tpu_custom_call.1} parent=91 // pred_check
          %p604 = pneg %p277
        $region98: #{tpu_custom_call.1} parent=91 // pred_check_branch
          %606 = sbr.rel (%p604) target = $region100
        $region99: #{tpu_custom_call.1} parent=91 // pred_region
          %607 = dma.done [#allocation6], 16
        $region100: #{tpu_custom_call.1} parent=91 // pred_fallthru
          _
        // Predicated region
        $region101: #{tpu_custom_call.1} parent=91 // pred_check
          %p608 = pneg %p319
        $region102: #{tpu_custom_call.1} parent=91 // pred_check_branch
          %610 = sbr.rel (%p608) target = $region104
        $region103: #{tpu_custom_call.1} parent=91 // pred_region
          %611 = dma.done [#allocation6], 16
        $region104: #{tpu_custom_call.1} parent=91 // pred_fallthru
          _
        %p612 = scmp.lt.s32.totalorder %s39, 1
        %s613 = scalar_select %p612, %s39, 1
        %p614 = scmp.lt.s32.totalorder %s38, 0
        %s615 = scalar_select %p614, %s38, 0
        %s616 = sadd.s32 %s615, %s613
        %s617 = smul.addr %s616, 8
        %s618 = scalar_lea.vmem %s0, %s617
        %p619 = pneg %p69
        %p620 = pneg %p66
        %p621 = scmp.lt.s32.totalorder %s39, 1
        %s622 = scalar_select %p621, %s39, 1
        %p623 = scmp.lt.s32.totalorder %s38, 0
        %s624 = scalar_select %p623, %s38, 0
        %s625 = sadd.s32 %s624, %s622
        %s626 = smul.addr %s625, 8
        %s627 = scalar_lea.vmem %s1, %s626
        %p628 = pneg %p97
        %p629 = pneg %p94
        %p630 = scmp.lt.s32.totalorder %s39, 1
        %s631 = scalar_select %p630, %s39, 1
        %p632 = scmp.lt.s32.totalorder %s38, 0
        %s633 = scalar_select %p632, %s38, 0
        %s634 = sadd.s32 %s633, %s631
        %s635 = smul.addr %s634, 8
        %s636 = scalar_lea.vmem %s2, %s635
        %p637 = pneg %p125
        %p638 = pneg %p122
        %p639 = pneg %p151
        %p640 = pneg %p148
        %p641 = pneg %p172
        %p642 = pneg %p169
        %p643 = pneg %p193
        %p644 = pneg %p190
        %p645 = pneg %p214
        %p646 = pneg %p211
        %p647 = pneg %p235
        %p648 = pneg %p232
        %p649 = pneg %p256
        %p650 = pneg %p253
        %p651 = pneg %p277
        %p652 = pneg %p274
        %p653 = pneg %p298
        %p654 = pneg %p295
        %p655 = pneg %p319
        %p656 = pneg %p316
        %p657 = pneg %p340
        %p658 = pneg %p337
        %p659 = pneg %p361
        %p660 = pneg %p358
        %p661 = pneg %p382
        %p662 = pneg %p379
        %p663 = pneg %p403
        %p664 = pneg %p400
        %p665 = pneg %p424
        %p666 = pneg %p421
        %p667 = pneg %p445
        %p668 = pneg %p442
        %p669 = pneg %p473
        %p670 = pneg %p470
        %s671 = sand.u32 %s460, 1
        %s672 = scalar_lea.sflag [#allocation4], %s671
        %s673 = sand.u32 %s460, 1
        %s674 = smul.addr %s673, 4
        %s675 = scalar_lea.vmem [#allocation8], %s674
        %p676 = scmp.lt.s32.totalorder %s39, 1
        %s677 = scalar_select %p676, %s39, 1
        %p678 = scmp.lt.s32.totalorder %s38, 0
        %s679 = scalar_select %p678, %s38, 0
        %s680 = sadd.s32 %s679, %s677
        %s681 = smul.addr %s680, 8
        %s682 = scalar_lea.vmem %s0, %s681
        %p683 = scmp.lt.s32.totalorder %s39, 1
        %s684 = scalar_select %p683, %s39, 1
        %p685 = scmp.lt.s32.totalorder %s38, 0
        %s686 = scalar_select %p685, %s38, 0
        %s687 = sadd.s32 %s686, %s684
        %s688 = smul.addr %s687, 8
        %s689 = scalar_lea.vmem %s1, %s688
        %p690 = scmp.lt.s32.totalorder %s39, 1
        %s691 = scalar_select %p690, %s39, 1
        %p692 = scmp.lt.s32.totalorder %s38, 0
        %s693 = scalar_select %p692, %s38, 0
        %s694 = sadd.s32 %s693, %s691
        %s695 = smul.addr %s694, 8
        %s696 = scalar_lea.vmem %s2, %s695
        %v698 = vld [vmem:[%s682] sm:$0xff]
        %v699 = vld [vmem:[%s689] sm:$0xff]
        %v700 = vld [vmem:[%s696] sm:$0xff]
        %v701 = vpack.c.bf16 %v698, %v698
        %v702 = vld [vmem:[%s4] sm:$0xf]
        %v703 = vld [vmem:[%s4 + $0x4] sm:$0xf]
        %v704 = vld [vmem:[%s4 + $0x8] sm:$0xf]
        %v705 = vld [vmem:[%s4 + $0xc] sm:$0xf]
        %v706 = vld [vmem:[%s4 + $0x10] sm:$0xf]
        %v707 = vld [vmem:[%s4 + $0x14] sm:$0xf]
        %v708 = vld [vmem:[%s4 + $0x18] sm:$0xf]
        %v709 = vld [vmem:[%s4 + $0x1c] sm:$0xf]
        %v710 = vld [vmem:[%s4 + $0x20] sm:$0xf]
        %v711 = vld [vmem:[%s4 + $0x24] sm:$0xf]
        %v712 = vld [vmem:[%s4 + $0x28] sm:$0xf]
        %v713 = vld [vmem:[%s4 + $0x2c] sm:$0xf]
        %v714 = vld [vmem:[%s4 + $0x30] sm:$0xf]
        %v715 = vld [vmem:[%s4 + $0x34] sm:$0xf]
        %v716 = vld [vmem:[%s4 + $0x38] sm:$0xf]
        %v717 = vld [vmem:[%s4 + $0x3c] sm:$0xf]
        %v718 = vld [vmem:[%s5] sm:$0x1]
        %v720 = vlaneseq
        %v721 = vshrl.u32 %v720, 7
        %v722 = vsub.s32 0, %v721
        %v723 = vrot.slane %v718, %v722
        %v741 = vunpack.c.l.b16 %v702
        %v742 = vunpack.c.l.b16 %v703
        %v743 = vunpack.c.l.b16 %v704
        %v744 = vunpack.c.l.b16 %v705
        %v745 = vunpack.c.l.b16 %v706
        %v746 = vunpack.c.l.b16 %v707
        %v747 = vunpack.c.l.b16 %v708
        %v748 = vunpack.c.l.b16 %v709
        %v749 = vunpack.c.l.b16 %v710
        %v750 = vunpack.c.l.b16 %v711
        %v751 = vunpack.c.l.b16 %v712
        %v752 = vunpack.c.l.b16 %v713
        %v753 = vunpack.c.l.b16 %v714
        %v754 = vunpack.c.l.b16 %v715
        %v755 = vunpack.c.l.b16 %v716
        %v756 = vunpack.c.l.b16 %v717
        %v757 = vpack.c.b16 %v742, %v741
        %v758 = vpack.c.b16 %v744, %v743
        %v759 = vpack.c.b16 %v746, %v745
        %v760 = vpack.c.b16 %v748, %v747
        %v761 = vpack.c.b16 %v750, %v749
        %v762 = vpack.c.b16 %v752, %v751
        %v763 = vpack.c.b16 %v754, %v753
        %v764 = vpack.c.b16 %v756, %v755
        %773 = vmatprep.subr.bf16.mxu0 0
        %774 = vmatpush1.bf16.msra.mxu0 %v764
        %775 = vmatprep.subr.bf16.mxu0 0
        %776 = vmatpush1.bf16.msra.mxu0 %v763
        %777 = vmatprep.subr.bf16.mxu0 0
        %778 = vmatpush1.bf16.msra.mxu0 %v762
        %779 = vmatprep.subr.bf16.mxu0 0
        %780 = vmatpush1.bf16.msra.mxu0 %v761
        %781 = vmatprep.subr.bf16.mxu0 0
        %782 = vmatpush1.bf16.msra.mxu0 %v760
        %783 = vmatprep.subr.bf16.mxu0 0
        %784 = vmatpush1.bf16.msra.mxu0 %v759
        %785 = vmatprep.subr.bf16.mxu0 0
        %786 = vmatpush1.bf16.msra.mxu0 %v758
        %787 = vmatprep.subr.bf16.mxu0 0
        %788 = vmatpush1.bf16.msra.mxu0 %v757
        %789 = vmatprep.subr.bf16.mxu0 0
        %790 = vmatpush2.bf16.msra.mxu0 0
        %791 = vmatprep.subr.bf16.mxu0 0
        %792 = vmatpush2.bf16.msra.mxu0 0
        %793 = vmatprep.subr.bf16.mxu0 0
        %794 = vmatpush2.bf16.msra.mxu0 0
        %795 = vmatprep.subr.bf16.mxu0 0
        %796 = vmatpush2.bf16.msra.mxu0 0
        %797 = vmatprep.subr.bf16.mxu0 0
        %798 = vmatpush2.bf16.msra.mxu0 0
        %799 = vmatprep.subr.bf16.mxu0 0
        %800 = vmatpush2.bf16.msra.mxu0 0
        %801 = vmatprep.subr.bf16.mxu0 0
        %802 = vmatpush2.bf16.msra.mxu0 0
        %803 = vmatprep.subr.bf16.mxu0 0
        %804 = vmatpush2.bf16.msra.mxu0 0
        %805 = vmatprep.mubr.bf16.mxu0 0
        %806 = vmatmul.mubr.bf16.gmra.mxu0 %v701
        %v807 = vpop.f32.mrf.mxu0
        %v808 = vadd.f32 %v723, %v807
        %v809 = vpop.f32.mrf.mxu0
        %v810 = vpop.f32.mrf.mxu0
        %v811 = vpop.f32.mrf.mxu0
        %812 = vdwg.mxu0
        %v813 = vmax.f32 %v808, 0.0
        %v814 = vpack.c.bf16 %v813, %v813
        %v815 = vld [vmem:[%s6] sm:$0xf]
        %v816 = vld [vmem:[%s6 + $0x4] sm:$0xf]
        %v817 = vld [vmem:[%s6 + $0x8] sm:$0xf]
        %v818 = vld [vmem:[%s6 + $0xc] sm:$0xf]
        %v819 = vld [vmem:[%s6 + $0x10] sm:$0xf]
        %v820 = vld [vmem:[%s6 + $0x14] sm:$0xf]
        %v821 = vld [vmem:[%s6 + $0x18] sm:$0xf]
        %v822 = vld [vmem:[%s6 + $0x1c] sm:$0xf]
        %v823 = vld [vmem:[%s6 + $0x20] sm:$0xf]
        %v824 = vld [vmem:[%s6 + $0x24] sm:$0xf]
        %v825 = vld [vmem:[%s6 + $0x28] sm:$0xf]
        %v826 = vld [vmem:[%s6 + $0x2c] sm:$0xf]
        %v827 = vld [vmem:[%s6 + $0x30] sm:$0xf]
        %v828 = vld [vmem:[%s6 + $0x34] sm:$0xf]
        %v829 = vld [vmem:[%s6 + $0x38] sm:$0xf]
        %v830 = vld [vmem:[%s6 + $0x3c] sm:$0xf]
        %v831 = vld [vmem:[%s7] sm:$0x1]
        %v833 = vlaneseq
        %v834 = vshrl.u32 %v833, 7
        %v835 = vsub.s32 0, %v834
        %v836 = vrot.slane %v831, %v835
        %v854 = vunpack.c.l.b16 %v815
        %v855 = vunpack.c.l.b16 %v816
        %v856 = vunpack.c.l.b16 %v817
        %v857 = vunpack.c.l.b16 %v818
        %v858 = vunpack.c.l.b16 %v819
        %v859 = vunpack.c.l.b16 %v820
        %v860 = vunpack.c.l.b16 %v821
        %v861 = vunpack.c.l.b16 %v822
        %v862 = vunpack.c.l.b16 %v823
        %v863 = vunpack.c.l.b16 %v824
        %v864 = vunpack.c.l.b16 %v825
        %v865 = vunpack.c.l.b16 %v826
        %v866 = vunpack.c.l.b16 %v827
        %v867 = vunpack.c.l.b16 %v828
        %v868 = vunpack.c.l.b16 %v829
        %v869 = vunpack.c.l.b16 %v830
        %v870 = vpack.c.b16 %v855, %v854
        %v871 = vpack.c.b16 %v857, %v856
        %v872 = vpack.c.b16 %v859, %v858
        %v873 = vpack.c.b16 %v861, %v860
        %v874 = vpack.c.b16 %v863, %v862
        %v875 = vpack.c.b16 %v865, %v864
        %v876 = vpack.c.b16 %v867, %v866
        %v877 = vpack.c.b16 %v869, %v868
        %886 = vmatprep.subr.bf16.mxu0 0
        %887 = vmatpush1.bf16.msra.mxu0 %v877
        %888 = vmatprep.subr.bf16.mxu0 0
        %889 = vmatpush1.bf16.msra.mxu0 %v876
        %890 = vmatprep.subr.bf16.mxu0 0
        %891 = vmatpush1.bf16.msra.mxu0 %v875
        %892 = vmatprep.subr.bf16.mxu0 0
        %893 = vmatpush1.bf16.msra.mxu0 %v874
        %894 = vmatprep.subr.bf16.mxu0 0
        %895 = vmatpush1.bf16.msra.mxu0 %v873
        %896 = vmatprep.subr.bf16.mxu0 0
        %897 = vmatpush1.bf16.msra.mxu0 %v872
        %898 = vmatprep.subr.bf16.mxu0 0
        %899 = vmatpush1.bf16.msra.mxu0 %v871
        %900 = vmatprep.subr.bf16.mxu0 0
        %901 = vmatpush1.bf16.msra.mxu0 %v870
        %902 = vmatprep.subr.bf16.mxu0 0
        %903 = vmatpush2.bf16.msra.mxu0 0
        %904 = vmatprep.subr.bf16.mxu0 0
        %905 = vmatpush2.bf16.msra.mxu0 0
        %906 = vmatprep.subr.bf16.mxu0 0
        %907 = vmatpush2.bf16.msra.mxu0 0
        %908 = vmatprep.subr.bf16.mxu0 0
        %909 = vmatpush2.bf16.msra.mxu0 0
        %910 = vmatprep.subr.bf16.mxu0 0
        %911 = vmatpush2.bf16.msra.mxu0 0
        %912 = vmatprep.subr.bf16.mxu0 0
        %913 = vmatpush2.bf16.msra.mxu0 0
        %914 = vmatprep.subr.bf16.mxu0 0
        %915 = vmatpush2.bf16.msra.mxu0 0
        %916 = vmatprep.subr.bf16.mxu0 0
        %917 = vmatpush2.bf16.msra.mxu0 0
        %918 = vmatprep.mubr.bf16.mxu0 0
        %919 = vmatmul.mubr.bf16.gmra.mxu0 %v814
        %v920 = vpop.f32.mrf.mxu0
        %v921 = vadd.f32 %v836, %v920
        %v922 = vpop.f32.mrf.mxu0
        %v923 = vpop.f32.mrf.mxu0
        %v924 = vpop.f32.mrf.mxu0
        %925 = vdwg.mxu0
        %v926 = vpack.c.bf16 %v699, %v699
        %v927 = vld [vmem:[%s8] sm:$0xf]
        %v928 = vld [vmem:[%s8 + $0x4] sm:$0xf]
        %v929 = vld [vmem:[%s8 + $0x8] sm:$0xf]
        %v930 = vld [vmem:[%s8 + $0xc] sm:$0xf]
        %v931 = vld [vmem:[%s8 + $0x10] sm:$0xf]
        %v932 = vld [vmem:[%s8 + $0x14] sm:$0xf]
        %v933 = vld [vmem:[%s8 + $0x18] sm:$0xf]
        %v934 = vld [vmem:[%s8 + $0x1c] sm:$0xf]
        %v935 = vld [vmem:[%s8 + $0x20] sm:$0xf]
        %v936 = vld [vmem:[%s8 + $0x24] sm:$0xf]
        %v937 = vld [vmem:[%s8 + $0x28] sm:$0xf]
        %v938 = vld [vmem:[%s8 + $0x2c] sm:$0xf]
        %v939 = vld [vmem:[%s8 + $0x30] sm:$0xf]
        %v940 = vld [vmem:[%s8 + $0x34] sm:$0xf]
        %v941 = vld [vmem:[%s8 + $0x38] sm:$0xf]
        %v942 = vld [vmem:[%s8 + $0x3c] sm:$0xf]
        %v943 = vld [vmem:[#allocation5] sm:$0x1]
        %v945 = vlaneseq
        %v946 = vshrl.u32 %v945, 7
        %v947 = vsub.s32 0, %v946
        %v948 = vrot.slane %v943, %v947
        %v966 = vunpack.c.l.b16 %v927
        %v967 = vunpack.c.l.b16 %v928
        %v968 = vunpack.c.l.b16 %v929
        %v969 = vunpack.c.l.b16 %v930
        %v970 = vunpack.c.l.b16 %v931
        %v971 = vunpack.c.l.b16 %v932
        %v972 = vunpack.c.l.b16 %v933
        %v973 = vunpack.c.l.b16 %v934
        %v974 = vunpack.c.l.b16 %v935
        %v975 = vunpack.c.l.b16 %v936
        %v976 = vunpack.c.l.b16 %v937
        %v977 = vunpack.c.l.b16 %v938
        %v978 = vunpack.c.l.b16 %v939
        %v979 = vunpack.c.l.b16 %v940
        %v980 = vunpack.c.l.b16 %v941
        %v981 = vunpack.c.l.b16 %v942
        %v982 = vpack.c.b16 %v967, %v966
        %v983 = vpack.c.b16 %v969, %v968
        %v984 = vpack.c.b16 %v971, %v970
        %v985 = vpack.c.b16 %v973, %v972
        %v986 = vpack.c.b16 %v975, %v974
        %v987 = vpack.c.b16 %v977, %v976
        %v988 = vpack.c.b16 %v979, %v978
        %v989 = vpack.c.b16 %v981, %v980
        %998 = vmatprep.subr.bf16.mxu0 0
        %999 = vmatpush1.bf16.msra.mxu0 %v989
        %1000 = vmatprep.subr.bf16.mxu0 0
        %1001 = vmatpush1.bf16.msra.mxu0 %v988
        %1002 = vmatprep.subr.bf16.mxu0 0
        %1003 = vmatpush1.bf16.msra.mxu0 %v987
        %1004 = vmatprep.subr.bf16.mxu0 0
        %1005 = vmatpush1.bf16.msra.mxu0 %v986
        %1006 = vmatprep.subr.bf16.mxu0 0
        %1007 = vmatpush1.bf16.msra.mxu0 %v985
        %1008 = vmatprep.subr.bf16.mxu0 0
        %1009 = vmatpush1.bf16.msra.mxu0 %v984
        %1010 = vmatprep.subr.bf16.mxu0 0
        %1011 = vmatpush1.bf16.msra.mxu0 %v983
        %1012 = vmatprep.subr.bf16.mxu0 0
        %1013 = vmatpush1.bf16.msra.mxu0 %v982
        %1014 = vmatprep.subr.bf16.mxu0 0
        %1015 = vmatpush2.bf16.msra.mxu0 0
        %1016 = vmatprep.subr.bf16.mxu0 0
        %1017 = vmatpush2.bf16.msra.mxu0 0
        %1018 = vmatprep.subr.bf16.mxu0 0
        %1019 = vmatpush2.bf16.msra.mxu0 0
        %1020 = vmatprep.subr.bf16.mxu0 0
        %1021 = vmatpush2.bf16.msra.mxu0 0
        %1022 = vmatprep.subr.bf16.mxu0 0
        %1023 = vmatpush2.bf16.msra.mxu0 0
        %1024 = vmatprep.subr.bf16.mxu0 0
        %1025 = vmatpush2.bf16.msra.mxu0 0
        %1026 = vmatprep.subr.bf16.mxu0 0
        %1027 = vmatpush2.bf16.msra.mxu0 0
        %1028 = vmatprep.subr.bf16.mxu0 0
        %1029 = vmatpush2.bf16.msra.mxu0 0
        %1030 = vmatprep.mubr.bf16.mxu0 0
        %1031 = vmatmul.mubr.bf16.gmra.mxu0 %v926
        %v1032 = vpop.f32.mrf.mxu0
        %v1033 = vadd.f32 %v948, %v1032
        %v1034 = vpop.f32.mrf.mxu0
        %v1035 = vpop.f32.mrf.mxu0
        %v1036 = vpop.f32.mrf.mxu0
        %1037 = vdwg.mxu0
        %v1038 = vmax.f32 %v1033, 0.0
        %v1039 = vpack.c.bf16 %v1038, %v1038
        %v1040 = vld [vmem:[%s10] sm:$0xf]
        %v1041 = vld [vmem:[%s10 + $0x4] sm:$0xf]
        %v1042 = vld [vmem:[%s10 + $0x8] sm:$0xf]
        %v1043 = vld [vmem:[%s10 + $0xc] sm:$0xf]
        %v1044 = vld [vmem:[%s10 + $0x10] sm:$0xf]
        %v1045 = vld [vmem:[%s10 + $0x14] sm:$0xf]
        %v1046 = vld [vmem:[%s10 + $0x18] sm:$0xf]
        %v1047 = vld [vmem:[%s10 + $0x1c] sm:$0xf]
        %v1048 = vld [vmem:[%s10 + $0x20] sm:$0xf]
        %v1049 = vld [vmem:[%s10 + $0x24] sm:$0xf]
        %v1050 = vld [vmem:[%s10 + $0x28] sm:$0xf]
        %v1051 = vld [vmem:[%s10 + $0x2c] sm:$0xf]
        %v1052 = vld [vmem:[%s10 + $0x30] sm:$0xf]
        %v1053 = vld [vmem:[%s10 + $0x34] sm:$0xf]
        %v1054 = vld [vmem:[%s10 + $0x38] sm:$0xf]
        %v1055 = vld [vmem:[%s10 + $0x3c] sm:$0xf]
        %v1056 = vld [vmem:[#allocation7] sm:$0x1]
        %v1058 = vlaneseq
        %v1059 = vshrl.u32 %v1058, 7
        %v1060 = vsub.s32 0, %v1059
        %v1061 = vrot.slane %v1056, %v1060
        %v1079 = vunpack.c.l.b16 %v1040
        %v1080 = vunpack.c.l.b16 %v1041
        %v1081 = vunpack.c.l.b16 %v1042
        %v1082 = vunpack.c.l.b16 %v1043
        %v1083 = vunpack.c.l.b16 %v1044
        %v1084 = vunpack.c.l.b16 %v1045
        %v1085 = vunpack.c.l.b16 %v1046
        %v1086 = vunpack.c.l.b16 %v1047
        %v1087 = vunpack.c.l.b16 %v1048
        %v1088 = vunpack.c.l.b16 %v1049
        %v1089 = vunpack.c.l.b16 %v1050
        %v1090 = vunpack.c.l.b16 %v1051
        %v1091 = vunpack.c.l.b16 %v1052
        %v1092 = vunpack.c.l.b16 %v1053
        %v1093 = vunpack.c.l.b16 %v1054
        %v1094 = vunpack.c.l.b16 %v1055
        %v1095 = vpack.c.b16 %v1080, %v1079
        %v1096 = vpack.c.b16 %v1082, %v1081
        %v1097 = vpack.c.b16 %v1084, %v1083
        %v1098 = vpack.c.b16 %v1086, %v1085
        %v1099 = vpack.c.b16 %v1088, %v1087
        %v1100 = vpack.c.b16 %v1090, %v1089
        %v1101 = vpack.c.b16 %v1092, %v1091
        %v1102 = vpack.c.b16 %v1094, %v1093
        %1111 = vmatprep.subr.bf16.mxu0 0
        %1112 = vmatpush1.bf16.msra.mxu0 %v1102
        %1113 = vmatprep.subr.bf16.mxu0 0
        %1114 = vmatpush1.bf16.msra.mxu0 %v1101
        %1115 = vmatprep.subr.bf16.mxu0 0
        %1116 = vmatpush1.bf16.msra.mxu0 %v1100
        %1117 = vmatprep.subr.bf16.mxu0 0
        %1118 = vmatpush1.bf16.msra.mxu0 %v1099
        %1119 = vmatprep.subr.bf16.mxu0 0
        %1120 = vmatpush1.bf16.msra.mxu0 %v1098
        %1121 = vmatprep.subr.bf16.mxu0 0
        %1122 = vmatpush1.bf16.msra.mxu0 %v1097
        %1123 = vmatprep.subr.bf16.mxu0 0
        %1124 = vmatpush1.bf16.msra.mxu0 %v1096
        %1125 = vmatprep.subr.bf16.mxu0 0
        %1126 = vmatpush1.bf16.msra.mxu0 %v1095
        %1127 = vmatprep.subr.bf16.mxu0 0
        %1128 = vmatpush2.bf16.msra.mxu0 0
        %1129 = vmatprep.subr.bf16.mxu0 0
        %1130 = vmatpush2.bf16.msra.mxu0 0
        %1131 = vmatprep.subr.bf16.mxu0 0
        %1132 = vmatpush2.bf16.msra.mxu0 0
        %1133 = vmatprep.subr.bf16.mxu0 0
        %1134 = vmatpush2.bf16.msra.mxu0 0
        %1135 = vmatprep.subr.bf16.mxu0 0
        %1136 = vmatpush2.bf16.msra.mxu0 0
        %1137 = vmatprep.subr.bf16.mxu0 0
        %1138 = vmatpush2.bf16.msra.mxu0 0
        %1139 = vmatprep.subr.bf16.mxu0 0
        %1140 = vmatpush2.bf16.msra.mxu0 0
        %1141 = vmatprep.subr.bf16.mxu0 0
        %1142 = vmatpush2.bf16.msra.mxu0 0
        %1143 = vmatprep.mubr.bf16.mxu0 0
        %1144 = vmatmul.mubr.bf16.gmra.mxu0 %v1039
        %v1145 = vpop.f32.mrf.mxu0
        %v1146 = vadd.f32 %v1061, %v1145
        %v1147 = vpop.f32.mrf.mxu0
        %v1148 = vpop.f32.mrf.mxu0
        %v1149 = vpop.f32.mrf.mxu0
        %1150 = vdwg.mxu0
        %v1151 = vpack.c.bf16 %v700, %v700
        %v1152 = vld [vmem:[%s12] sm:$0xf]
        %v1153 = vld [vmem:[%s12 + $0x4] sm:$0xf]
        %v1154 = vld [vmem:[%s12 + $0x8] sm:$0xf]
        %v1155 = vld [vmem:[%s12 + $0xc] sm:$0xf]
        %v1156 = vld [vmem:[%s12 + $0x10] sm:$0xf]
        %v1157 = vld [vmem:[%s12 + $0x14] sm:$0xf]
        %v1158 = vld [vmem:[%s12 + $0x18] sm:$0xf]
        %v1159 = vld [vmem:[%s12 + $0x1c] sm:$0xf]
        %v1160 = vld [vmem:[%s12 + $0x20] sm:$0xf]
        %v1161 = vld [vmem:[%s12 + $0x24] sm:$0xf]
        %v1162 = vld [vmem:[%s12 + $0x28] sm:$0xf]
        %v1163 = vld [vmem:[%s12 + $0x2c] sm:$0xf]
        %v1164 = vld [vmem:[%s12 + $0x30] sm:$0xf]
        %v1165 = vld [vmem:[%s12 + $0x34] sm:$0xf]
        %v1166 = vld [vmem:[%s12 + $0x38] sm:$0xf]
        %v1167 = vld [vmem:[%s12 + $0x3c] sm:$0xf]
        %v1168 = vld [vmem:[%s13] sm:$0x1]
        %v1170 = vlaneseq
        %v1171 = vshrl.u32 %v1170, 7
        %v1172 = vsub.s32 0, %v1171
        %v1173 = vrot.slane %v1168, %v1172
        %v1191 = vunpack.c.l.b16 %v1152
        %v1192 = vunpack.c.l.b16 %v1153
        %v1193 = vunpack.c.l.b16 %v1154
        %v1194 = vunpack.c.l.b16 %v1155
        %v1195 = vunpack.c.l.b16 %v1156
        %v1196 = vunpack.c.l.b16 %v1157
        %v1197 = vunpack.c.l.b16 %v1158
        %v1198 = vunpack.c.l.b16 %v1159
        %v1199 = vunpack.c.l.b16 %v1160
        %v1200 = vunpack.c.l.b16 %v1161
        %v1201 = vunpack.c.l.b16 %v1162
        %v1202 = vunpack.c.l.b16 %v1163
        %v1203 = vunpack.c.l.b16 %v1164
        %v1204 = vunpack.c.l.b16 %v1165
        %v1205 = vunpack.c.l.b16 %v1166
        %v1206 = vunpack.c.l.b16 %v1167
        %v1207 = vpack.c.b16 %v1192, %v1191
        %v1208 = vpack.c.b16 %v1194, %v1193
        %v1209 = vpack.c.b16 %v1196, %v1195
        %v1210 = vpack.c.b16 %v1198, %v1197
        %v1211 = vpack.c.b16 %v1200, %v1199
        %v1212 = vpack.c.b16 %v1202, %v1201
        %v1213 = vpack.c.b16 %v1204, %v1203
        %v1214 = vpack.c.b16 %v1206, %v1205
        %1223 = vmatprep.subr.bf16.mxu0 0
        %1224 = vmatpush1.bf16.msra.mxu0 %v1214
        %1225 = vmatprep.subr.bf16.mxu0 0
        %1226 = vmatpush1.bf16.msra.mxu0 %v1213
        %1227 = vmatprep.subr.bf16.mxu0 0
        %1228 = vmatpush1.bf16.msra.mxu0 %v1212
        %1229 = vmatprep.subr.bf16.mxu0 0
        %1230 = vmatpush1.bf16.msra.mxu0 %v1211
        %1231 = vmatprep.subr.bf16.mxu0 0
        %1232 = vmatpush1.bf16.msra.mxu0 %v1210
        %1233 = vmatprep.subr.bf16.mxu0 0
        %1234 = vmatpush1.bf16.msra.mxu0 %v1209
        %1235 = vmatprep.subr.bf16.mxu0 0
        %1236 = vmatpush1.bf16.msra.mxu0 %v1208
        %1237 = vmatprep.subr.bf16.mxu0 0
        %1238 = vmatpush1.bf16.msra.mxu0 %v1207
        %1239 = vmatprep.subr.bf16.mxu0 0
        %1240 = vmatpush2.bf16.msra.mxu0 0
        %1241 = vmatprep.subr.bf16.mxu0 0
        %1242 = vmatpush2.bf16.msra.mxu0 0
        %1243 = vmatprep.subr.bf16.mxu0 0
        %1244 = vmatpush2.bf16.msra.mxu0 0
        %1245 = vmatprep.subr.bf16.mxu0 0
        %1246 = vmatpush2.bf16.msra.mxu0 0
        %1247 = vmatprep.subr.bf16.mxu0 0
        %1248 = vmatpush2.bf16.msra.mxu0 0
        %1249 = vmatprep.subr.bf16.mxu0 0
        %1250 = vmatpush2.bf16.msra.mxu0 0
        %1251 = vmatprep.subr.bf16.mxu0 0
        %1252 = vmatpush2.bf16.msra.mxu0 0
        %1253 = vmatprep.subr.bf16.mxu0 0
        %1254 = vmatpush2.bf16.msra.mxu0 0
        %1255 = vmatprep.mubr.bf16.mxu0 0
        %1256 = vmatmul.mubr.bf16.gmra.mxu0 %v1151
        %v1257 = vpop.f32.mrf.mxu0
        %v1258 = vadd.f32 %v1173, %v1257
        %v1259 = vpop.f32.mrf.mxu0
        %v1260 = vpop.f32.mrf.mxu0
        %v1261 = vpop.f32.mrf.mxu0
        %1262 = vdwg.mxu0
        %v1263 = vmax.f32 %v1258, 0.0
        %v1264 = vpack.c.bf16 %v921, %v921
        %v1265 = vld [vmem:[%s14] sm:$0xf]
        %v1266 = vld [vmem:[%s14 + $0x4] sm:$0xf]
        %v1267 = vld [vmem:[%s14 + $0x8] sm:$0xf]
        %v1268 = vld [vmem:[%s14 + $0xc] sm:$0xf]
        %v1269 = vpack.c.bf16 %v1146, %v1146
        %v1270 = vld [vmem:[%s15] sm:$0xf]
        %v1271 = vld [vmem:[%s15 + $0x4] sm:$0xf]
        %v1272 = vld [vmem:[%s15 + $0x8] sm:$0xf]
        %v1273 = vld [vmem:[%s15 + $0xc] sm:$0xf]
        %v1278 = vunpack.c.l.b16 %v1270
        %v1279 = vunpack.c.l.b16 %v1271
        %v1280 = vunpack.c.l.b16 %v1272
        %v1281 = vunpack.c.l.b16 %v1273
        %v1282 = vpack.c.b16 %v1279, %v1278
        %v1283 = vpack.c.b16 %v1281, %v1280
        %vm1286 = vcmask 261120
        %v1288 = vsel %vm1286, %v1269, 0
        %1290 = vmatprep.subr.bf16.mxu0 0
        %1291 = vmatpush1.bf16.msra.mxu0 0
        %1292 = vmatprep.subr.bf16.mxu0 0
        %1293 = vmatpush1.bf16.msra.mxu0 0
        %1294 = vmatprep.subr.bf16.mxu0 0
        %1295 = vmatpush1.bf16.msra.mxu0 0
        %1296 = vmatprep.subr.bf16.mxu0 0
        %1297 = vmatpush1.bf16.msra.mxu0 0
        %1298 = vmatprep.subr.bf16.mxu0 0
        %1299 = vmatpush1.bf16.msra.mxu0 0
        %1300 = vmatprep.subr.bf16.mxu0 0
        %1301 = vmatpush1.bf16.msra.mxu0 0
        %1302 = vmatprep.subr.bf16.mxu0 0
        %1303 = vmatpush1.bf16.msra.mxu0 %v1283
        %1304 = vmatprep.subr.bf16.mxu0 0
        %1305 = vmatpush1.bf16.msra.mxu0 %v1282
        %1306 = vmatprep.subr.bf16.mxu0 0
        %1307 = vmatpush2.bf16.msra.mxu0 0
        %1308 = vmatprep.subr.bf16.mxu0 0
        %1309 = vmatpush2.bf16.msra.mxu0 0
        %1310 = vmatprep.subr.bf16.mxu0 0
        %1311 = vmatpush2.bf16.msra.mxu0 0
        %1312 = vmatprep.subr.bf16.mxu0 0
        %1313 = vmatpush2.bf16.msra.mxu0 0
        %1314 = vmatprep.subr.bf16.mxu0 0
        %1315 = vmatpush2.bf16.msra.mxu0 0
        %1316 = vmatprep.subr.bf16.mxu0 0
        %1317 = vmatpush2.bf16.msra.mxu0 0
        %1318 = vmatprep.subr.bf16.mxu0 0
        %1319 = vmatpush2.bf16.msra.mxu0 0
        %1320 = vmatprep.subr.bf16.mxu0 0
        %1321 = vmatpush2.bf16.msra.mxu0 0
        %1322 = vmatprep.mubr.bf16.mxu0 0
        %1323 = vmatmul.mubr.bf16.gmra.mxu0 %v1288
        %v1324 = vpop.f32.mrf.mxu0
        %v1325 = vadd.f32 0.0, %v1324
        %v1326 = vpop.f32.mrf.mxu0
        %v1327 = vpop.f32.mrf.mxu0
        %v1328 = vpop.f32.mrf.mxu0
        %1329 = vdwg.mxu0
        %v1334 = vunpack.c.l.b16 %v1265
        %v1335 = vunpack.c.l.b16 %v1266
        %v1336 = vunpack.c.l.b16 %v1267
        %v1337 = vunpack.c.l.b16 %v1268
        %v1338 = vpack.c.b16 %v1335, %v1334
        %v1339 = vpack.c.b16 %v1337, %v1336
        %v1343 = vsel %vm1286, %v1264, 0
        %1345 = vmatprep.subr.bf16.mxu0 0
        %1346 = vmatpush1.bf16.msra.mxu0 0
        %1347 = vmatprep.subr.bf16.mxu0 0
        %1348 = vmatpush1.bf16.msra.mxu0 0
        %1349 = vmatprep.subr.bf16.mxu0 0
        %1350 = vmatpush1.bf16.msra.mxu0 0
        %1351 = vmatprep.subr.bf16.mxu0 0
        %1352 = vmatpush1.bf16.msra.mxu0 0
        %1353 = vmatprep.subr.bf16.mxu0 0
        %1354 = vmatpush1.bf16.msra.mxu0 0
        %1355 = vmatprep.subr.bf16.mxu0 0
        %1356 = vmatpush1.bf16.msra.mxu0 0
        %1357 = vmatprep.subr.bf16.mxu0 0
        %1358 = vmatpush1.bf16.msra.mxu0 %v1339
        %1359 = vmatprep.subr.bf16.mxu0 0
        %1360 = vmatpush1.bf16.msra.mxu0 %v1338
        %1361 = vmatprep.subr.bf16.mxu0 0
        %1362 = vmatpush2.bf16.msra.mxu0 0
        %1363 = vmatprep.subr.bf16.mxu0 0
        %1364 = vmatpush2.bf16.msra.mxu0 0
        %1365 = vmatprep.subr.bf16.mxu0 0
        %1366 = vmatpush2.bf16.msra.mxu0 0
        %1367 = vmatprep.subr.bf16.mxu0 0
        %1368 = vmatpush2.bf16.msra.mxu0 0
        %1369 = vmatprep.subr.bf16.mxu0 0
        %1370 = vmatpush2.bf16.msra.mxu0 0
        %1371 = vmatprep.subr.bf16.mxu0 0
        %1372 = vmatpush2.bf16.msra.mxu0 0
        %1373 = vmatprep.subr.bf16.mxu0 0
        %1374 = vmatpush2.bf16.msra.mxu0 0
        %1375 = vmatprep.subr.bf16.mxu0 0
        %1376 = vmatpush2.bf16.msra.mxu0 0
        %1377 = vmatprep.mubr.bf16.mxu0 0
        %1378 = vmatmul.mubr.bf16.gmra.mxu0 %v1343
        %v1379 = vpop.f32.mrf.mxu0
        %v1380 = vadd.f32 %v1325, %v1379
        %v1381 = vpop.f32.mrf.mxu0
        %v1382 = vpop.f32.mrf.mxu0
        %v1383 = vpop.f32.mrf.mxu0
        %1384 = vdwg.mxu0
        %v1385 = vpack.c.bf16 %v1263, %v1263
        %v1386 = vld [vmem:[%s16] sm:$0xf]
        %v1387 = vld [vmem:[%s16 + $0x4] sm:$0xf]
        %v1388 = vld [vmem:[%s16 + $0x8] sm:$0xf]
        %v1389 = vld [vmem:[%s16 + $0xc] sm:$0xf]
        %v1394 = vunpack.c.l.b16 %v1386
        %v1395 = vunpack.c.l.b16 %v1387
        %v1396 = vunpack.c.l.b16 %v1388
        %v1397 = vunpack.c.l.b16 %v1389
        %v1398 = vpack.c.b16 %v1395, %v1394
        %v1399 = vpack.c.b16 %v1397, %v1396
        %v1403 = vsel %vm1286, %v1385, 0
        %1405 = vmatprep.subr.bf16.mxu0 0
        %1406 = vmatpush1.bf16.msra.mxu0 0
        %1407 = vmatprep.subr.bf16.mxu0 0
        %1408 = vmatpush1.bf16.msra.mxu0 0
        %1409 = vmatprep.subr.bf16.mxu0 0
        %1410 = vmatpush1.bf16.msra.mxu0 0
        %1411 = vmatprep.subr.bf16.mxu0 0
        %1412 = vmatpush1.bf16.msra.mxu0 0
        %1413 = vmatprep.subr.bf16.mxu0 0
        %1414 = vmatpush1.bf16.msra.mxu0 0
        %1415 = vmatprep.subr.bf16.mxu0 0
        %1416 = vmatpush1.bf16.msra.mxu0 0
        %1417 = vmatprep.subr.bf16.mxu0 0
        %1418 = vmatpush1.bf16.msra.mxu0 %v1399
        %1419 = vmatprep.subr.bf16.mxu0 0
        %1420 = vmatpush1.bf16.msra.mxu0 %v1398
        %1421 = vmatprep.subr.bf16.mxu0 0
        %1422 = vmatpush2.bf16.msra.mxu0 0
        %1423 = vmatprep.subr.bf16.mxu0 0
        %1424 = vmatpush2.bf16.msra.mxu0 0
        %1425 = vmatprep.subr.bf16.mxu0 0
        %1426 = vmatpush2.bf16.msra.mxu0 0
        %1427 = vmatprep.subr.bf16.mxu0 0
        %1428 = vmatpush2.bf16.msra.mxu0 0
        %1429 = vmatprep.subr.bf16.mxu0 0
        %1430 = vmatpush2.bf16.msra.mxu0 0
        %1431 = vmatprep.subr.bf16.mxu0 0
        %1432 = vmatpush2.bf16.msra.mxu0 0
        %1433 = vmatprep.subr.bf16.mxu0 0
        %1434 = vmatpush2.bf16.msra.mxu0 0
        %1435 = vmatprep.subr.bf16.mxu0 0
        %1436 = vmatpush2.bf16.msra.mxu0 0
        %1437 = vmatprep.mubr.bf16.mxu0 0
        %1438 = vmatmul.mubr.bf16.gmra.mxu0 %v1403
        %v1439 = vpop.f32.mrf.mxu0
        %v1440 = vadd.f32 0.0, %v1439
        %v1441 = vpop.f32.mrf.mxu0
        %v1442 = vpop.f32.mrf.mxu0
        %v1443 = vpop.f32.mrf.mxu0
        %1444 = vdwg.mxu0
        %v1445 = vadd.f32 %v1380, %v1440
        %v1446 = vld [vmem:[%s17] sm:$0x1]
        %v1448 = vlaneseq
        %v1449 = vshrl.u32 %v1448, 7
        %v1450 = vsub.s32 0, %v1449
        %v1451 = vrot.slane %v1446, %v1450
        %v1453 = vadd.f32 %v1445, %v1451
        %v1454 = vld [vmem:[#allocation2] sm:$0xff]
        %v1455 = vadd.f32 %v1453, %v1454
        %v1456 = vpack.c.bf16 %v1455, %v1455
        %vm1457 = vcmask 257024
        %1458 = vst.msk [vmem:[%s675] sm:$0xf] %vm1457, %v1456
        %s1459 = sand.u32 %s460, 1
        %s1460 = scalar_lea.sflag [#allocation4], %s1459
        %s1461 = sand.u32 %s460, 1
        %s1462 = smul.addr %s1461, 4
        %s1463 = scalar_lea.vmem [#allocation8], %s1462
        // Predicated region
        $region105: #{tpu_custom_call.1} parent=91 // pred_check
          %p1464 = pneg %p470
        $region106: #{tpu_custom_call.1} parent=91 // pred_check_branch
          %1466 = sbr.rel (%p1464) target = $region108
        $region107: #{tpu_custom_call.1} parent=91 // pred_region
          %s1468 = ssub.s32 64, 64
          %1469 = vsyncadd %s1460, %s1468
          %s1470 = sadd.s32 %s38, %s39
          %s1471 = smul.addr %s1470, 64
          %s1472 = scalar_lea.hbm %s18, %s1471
          %s1474 = sshll.u32 %s1463, 4
          %s1475 = int_to_ptr.vmem [resolvable:$true] %s1474
          %1477 = dma.vmem_to_hbm [thread:$0]  %s1475, 64, %s1472, %s1460
        $region108: #{tpu_custom_call.1} parent=91 // pred_fallthru
          _
      $region92: #{tpu_custom_call.1} parent=5 // pred_fallthru
        _
      %p1478 = scmp.le.s32.totalorder 2, %s29
      // Predicated region
      $region109: #{tpu_custom_call.1} parent=5 // pred_check
        %p1479 = pneg %p1478
      $region110: #{tpu_custom_call.1} parent=5 // pred_check_branch
        %1481 = sbr.rel (%p1479) target = $region112
      $region111: #{tpu_custom_call.1} parent=5 // pred_region
        %s1482 = ssub.s32 %s29, 2
        // Predicated region
        $region113: #{tpu_custom_call.1} parent=111 // pred_check
          %p1483 = pneg %p476
        $region114: #{tpu_custom_call.1} parent=111 // pred_check_branch
          %1485 = sbr.rel (%p1483) target = $region116
        $region115: #{tpu_custom_call.1} parent=111 // pred_region
          %s1486 = sand.u32 %s461, 1
          %s1487 = scalar_lea.sflag [#allocation4], %s1486
          %s1488 = sand.u32 %s461, 1
          %s1489 = smul.addr %s1488, 4
          %s1490 = scalar_lea.vmem [#allocation8], %s1489
          %1491 = dma.done %s1487, 64
        $region116: #{tpu_custom_call.1} parent=111 // pred_fallthru
          _
      $region112: #{tpu_custom_call.1} parent=5 // pred_fallthru
        _
    $region6: #{tpu_custom_call.1} parent=1 // loop_footer
      %s33 = sadd.s32 1, %s29
    $region7: #{tpu_custom_call.1} parent=1 // loop_footer_branch
      %28 = sbr.rel target = $region3
    $region8: #{tpu_custom_call.1} parent=1 // loop_exit
      _
    %1492 = vsyncpa [#allocation3], 1
    %s1493 = scalar_lea.sflag [#allocation3], 1
    %1494 = vsyncpa %s1493, 1
    %1495 = vsyncpa [#allocation6], 1
    %1496 = vsyncpa [#allocation4], 1
    %s1497 = scalar_lea.sflag [#allocation4], 1
    %1498 = vsyncpa %s1497, 1

</llo_original>
